<compile_context>
chip_gen: v6e
topology: v6e:2x2x1
jax: 0.10.0
libtpu: 0.0.40
codegen_flags: <defaults>
</compile_context>

<pallas_src>
import functools

import jax
import jax.numpy as jnp
from jax.experimental import pallas as pl
from jax.experimental.pallas import tpu as pltpu


def _gvr_kernel(q_ref, x_ref, wkv_ref, w1_ref, b1_ref, w2_ref, b2_ref, out_ref,
                *, num_gestures):
    # One grid step == one batch element (grid=(B,), "parallel" -> both v7x TCs).
    #   q_ref:   (G, 2*dm)       bf16  gesture queries, zero-padded over the V half
    #   x_ref:   (T, D)          bf16  this batch element's frames
    #   wkv_ref: (D, 2*dm)       bf16  [Wk | Wv] fused projection
    #   w1_ref:  (G, 2*dm, nfp)  bf16  per-gesture fc1 slab, zero rows on the K half
    #   b1_ref:  (1, nfp)        f32
    #   w2_ref:  (nfp, cpad)     bf16
    #   b2_ref:  (1, cpad)       f32
    #   out_ref: (8, cpad)       f32   row 0 holds the logits (8 = sublane pad)
    x = x_ref[...]                                                     # (T, D)

    # Fused K|V projection: one MXU matmul instead of two.
    kv = jnp.dot(x, wkv_ref[...],
                 preferred_element_type=jnp.float32).astype(jnp.bfloat16)  # (T, 2dm)

    # Scores: NT-form dot_general (contract dim 1 of both operands) -> MXU
    # transposed-operand path, no XLU transpose of kv.  The zero V-half of q
    # means only the K columns contribute.
    s = jax.lax.dot_general(q_ref[...], kv, (((1,), (1,)), ((), ())),
                            preferred_element_type=jnp.float32)        # (G, T) f32

    # Softmax over frames (f32 math; reciprocal on the EUP).
    s = s - jnp.max(s, axis=-1, keepdims=True)
    p = jnp.exp(s)
    p = p * pl.reciprocal(jnp.sum(p, axis=-1, keepdims=True), approx=True)

    # Attention output.  Columns [dm:2dm] hold P @ V; columns [:dm] hold P @ K,
    # which is killed by the zero K-half rows of w1_ref below (no flatten
    # scratch, no per-gesture scatter stores).
    o = jnp.dot(p.astype(jnp.bfloat16), kv,
                preferred_element_type=jnp.float32).astype(jnp.bfloat16)  # (G, 2dm)

    # fc1: h[f] = sum_{g,d} O[g,d] * W1[g,d,f], as G independent per-gesture
    # (1,2dm)@(2dm,nfp) matvecs summed on the VPU (replaces 30 masked stores).
    parts = [jnp.dot(o[g:g + 1, :], w1_ref[g],
                     preferred_element_type=jnp.float32)
             for g in range(num_gestures)]
    h = b1_ref[...]
    for part in parts:
        h = h + part                                                   # (1, nfp)
    h = jnp.maximum(h, 0.0)                                            # ReLU

    # fc2 (lane-dense, zero-padded classifier head).
    y = jnp.dot(h.astype(jnp.bfloat16), w2_ref[...],
                preferred_element_type=jnp.float32) + b2_ref[...]      # (1, cpad)
    out_ref[...] = jnp.broadcast_to(y, out_ref.shape).astype(out_ref.dtype)


def gvr_forward(x, params):
    """x: (B, T, D) float32.  Returns (B, num_classes) float32."""
    B, T, D = x.shape
    gest = params["gest_fea"]          # (G, 512)  frozen
    wq = params["wq"]                  # (512, d_model)
    wk = params["wk"]                  # (D, d_model)
    wv = params["wv"]                  # (D, d_model)
    w1 = params["w1"]                  # (G, d_model, num_f_maps)
    b1 = params["b1"]                  # (1, num_f_maps)
    w2 = params["w2"]                  # (num_f_maps, num_classes)
    b2 = params["b2"]                  # (1, num_classes)

    G = gest.shape[0]
    d_model = wq.shape[1]
    num_f_maps = w1.shape[2]
    num_classes = w2.shape[1]
    nf_pad = ((num_f_maps + 127) // 128) * 128
    c_pad = ((num_classes + 127) // 128) * 128
    bf16 = jnp.bfloat16

    # ---- Hoisted, grid-invariant preprocessing (outside the kernel) ----
    q = jnp.dot(gest, wq) * (1.0 / float(d_model) ** 0.5)              # (G, dm)
    q_pad = jnp.concatenate([q, jnp.zeros_like(q)], axis=1)            # (G, 2dm)
    wkv = jnp.concatenate([wk, wv], axis=1)                            # (D, 2dm)
    # fc1 slab per gesture over the fused KV layout: zero rows for the K half,
    # w1[g, d, f] sits at row d_model + d; columns zero-padded to nf_pad.
    w1e = jnp.concatenate([jnp.zeros_like(w1), w1], axis=1)            # (G, 2dm, nf)
    w1e = jnp.pad(w1e, ((0, 0), (0, 0), (0, nf_pad - num_f_maps)))
    b1p = jnp.pad(b1, ((0, 0), (0, nf_pad - num_f_maps))).astype(jnp.float32)
    w2p = jnp.pad(w2, ((0, nf_pad - num_f_maps), (0, c_pad - num_classes)))
    b2p = jnp.pad(b2, ((0, 0), (0, c_pad - num_classes))).astype(jnp.float32)

    # bf16 MXU operands (softmax / accumulation stay f32 in-kernel).
    q_pad = q_pad.astype(bf16)
    wkv = wkv.astype(bf16)
    w1e = w1e.astype(bf16)
    w2p = w2p.astype(bf16)
    x_bf = x.astype(bf16)

    kernel = functools.partial(_gvr_kernel, num_gestures=G)

    flops = B * (2 * T * D * 2 * d_model           # KV projection
                 + 2 * G * T * 2 * d_model         # scores
                 + 2 * G * T * 2 * d_model         # attention output
                 + 2 * G * 2 * d_model * nf_pad    # fc1
                 + 2 * nf_pad * c_pad)             # fc2
    bytes_accessed = sum(int(a.size) * a.dtype.itemsize
                         for a in (q_pad, x_bf, wkv, w1e, b1p, w2p, b2p))
    bytes_accessed += B * 8 * c_pad * 4
    cost = pl.CostEstimate(flops=int(flops),
                           transcendentals=int(B * G * (T + 1)),
                           bytes_accessed=int(bytes_accessed))

    out = pl.pallas_call(
        kernel,
        out_shape=jax.ShapeDtypeStruct((B, 8, c_pad), jnp.float32),
        grid_spec=pltpu.PrefetchScalarGridSpec(
            num_scalar_prefetch=0,
            grid=(B,),                                  # one batch element / step
            in_specs=[
                pl.BlockSpec((G, 2 * d_model), lambda b: (0, 0)),             # q_pad
                pl.BlockSpec((None, T, D), lambda b: (b, 0, 0)),              # x
                pl.BlockSpec((D, 2 * d_model), lambda b: (0, 0)),             # wkv
                pl.BlockSpec((G, 2 * d_model, nf_pad), lambda b: (0, 0, 0)),  # w1e
                pl.BlockSpec((1, nf_pad), lambda b: (0, 0)),                  # b1
                pl.BlockSpec((nf_pad, c_pad), lambda b: (0, 0)),              # w2
                pl.BlockSpec((1, c_pad), lambda b: (0, 0)),                   # b2
            ],
            out_specs=pl.BlockSpec((None, 8, c_pad), lambda b: (b, 0, 0)),
        ),
        compiler_params=pltpu.CompilerParams(
            dimension_semantics=("parallel",)),
        cost_estimate=cost,
    )(q_pad, x_bf, wkv, w1e, b1p, w2p, b2p)
    return out[:, 0, :num_classes]


def init_params(key, *, num_f_dim, num_gest_f, d_model, num_gestures,
                num_f_maps, num_classes):
    ks = jax.random.split(key, 8)
    s = 0.02
    return {
        # frozen "CLIP text" gesture features (synthetic, deterministic)
        "gest_fea": jax.random.normal(ks[0], (num_gestures, num_gest_f), jnp.float32),
        "wq": s * jax.random.normal(ks[1], (num_gest_f, d_model), jnp.float32),
        "wk": s * jax.random.normal(ks[2], (num_f_dim, d_model), jnp.float32),
        "wv": s * jax.random.normal(ks[3], (num_f_dim, d_model), jnp.float32),
        # fc1: Linear(num_gestures * d_model -> num_f_maps), stored per-gesture
        # with w1[g, d, f] == W_fc1[f, g*d_model + d]
        "w1": s * jax.random.normal(ks[4], (num_gestures, d_model, num_f_maps), jnp.float32),
        "b1": s * jax.random.normal(ks[5], (1, num_f_maps), jnp.float32),
        # fc2: Linear(num_f_maps -> num_classes)
        "w2": s * jax.random.normal(ks[6], (num_f_maps, num_classes), jnp.float32),
        "b2": s * jax.random.normal(ks[7], (1, num_classes), jnp.float32),
    }


if __name__ == "__main__":
    # Small, module-consistent shapes.
    B, T = 2, 16              # batch, number of frames
    num_f_dim = 32            # visual feature dim ("self.dim")
    num_gest_f = 512          # CLIP ViT-B/32 text width
    num_gestures = 15         # len(gest_list)
    d_model = 32
    num_f_maps = 64
    num_classes = 10

    key = jax.random.PRNGKey(0)
    kx, kp = jax.random.split(key)
    x = jax.random.normal(kx, (B, T, num_f_dim), jnp.float32)   # layout: (B, T, D)
    params = init_params(kp, num_f_dim=num_f_dim, num_gest_f=num_gest_f,
                         d_model=d_model, num_gestures=num_gestures,
                         num_f_maps=num_f_maps, num_classes=num_classes)

    out = gvr_forward(x, params)
    jax.block_until_ready(out)
    assert out.shape == (B, num_classes), out.shape
    print("KERNEL_OK")
</pallas_src>

<mosaic_0001>
module attributes {stable_mosaic.version = 11 : i64} {
  func.func @_gvr_kernel(%arg0: i32, %arg1: memref<15x64xbf16, #tpu.memory_space<vmem>>, %arg2: memref<1x16x32xbf16, #tpu.memory_space<vmem>>, %arg3: memref<32x64xbf16, #tpu.memory_space<vmem>>, %arg4: memref<15x64x128xbf16, #tpu.memory_space<vmem>>, %arg5: memref<1x128xf32, #tpu.memory_space<vmem>>, %arg6: memref<128x128xbf16, #tpu.memory_space<vmem>>, %arg7: memref<1x128xf32, #tpu.memory_space<vmem>>, %arg8: memref<1x8x128xf32, #tpu.memory_space<vmem>>) attributes {dimension_semantics = [#tpu.dimension_semantics<parallel>], iteration_bounds = array<i64: 2>, scalar_prefetch = 0 : i64, scratch_operands = 0 : i64, tpu.core_type = #tpu.core_type<tc>, window_params = [{pipeline_mode = #tpu.pipeline_mode<synchronous>, transform_indices = @transform_0, window_bounds = array<i64: 15, 64>}, {transform_indices = @transform_1, window_bounds = array<i64: 1, 16, 32>}, {pipeline_mode = #tpu.pipeline_mode<synchronous>, transform_indices = @transform_2, window_bounds = array<i64: 32, 64>}, {pipeline_mode = #tpu.pipeline_mode<synchronous>, transform_indices = @transform_3, window_bounds = array<i64: 15, 64, 128>}, {pipeline_mode = #tpu.pipeline_mode<synchronous>, transform_indices = @transform_4, window_bounds = array<i64: 1, 128>}, {pipeline_mode = #tpu.pipeline_mode<synchronous>, transform_indices = @transform_5, window_bounds = array<i64: 128, 128>}, {pipeline_mode = #tpu.pipeline_mode<synchronous>, transform_indices = @transform_6, window_bounds = array<i64: 1, 128>}, {transform_indices = @transform_7, window_bounds = array<i64: 1, 8, 128>}]} {
    %c0 = arith.constant 0 : index
    %c0_0 = arith.constant 0 : index
    %c0_1 = arith.constant 0 : index
    %0 = vector.load %arg2[%c0, %c0_0, %c0_1] : memref<1x16x32xbf16, #tpu.memory_space<vmem>>, vector<1x16x32xbf16>
    %1 = vector.shape_cast %0 : vector<1x16x32xbf16> to vector<16x32xbf16>
    %c0_2 = arith.constant 0 : index
    %c0_3 = arith.constant 0 : index
    %2 = vector.load %arg3[%c0_2, %c0_3] : memref<32x64xbf16, #tpu.memory_space<vmem>>, vector<32x64xbf16>
    %cst = arith.constant dense<0.000000e+00> : vector<16x64xf32>
    %3 = tpu.matmul %1, %2, %cst {dimension_numbers = #tpu.dot_dimension_numbers<[1], [0], [0], [1], [0, 0, 1, 1], [], []>} : vector<16x32xbf16>, vector<32x64xbf16>, vector<16x64xf32> -> vector<16x64xf32>
    %4 = arith.truncf %3 : vector<16x64xf32> to vector<16x64xbf16>
    %c0_4 = arith.constant 0 : index
    %c0_5 = arith.constant 0 : index
    %5 = vector.load %arg1[%c0_4, %c0_5] : memref<15x64xbf16, #tpu.memory_space<vmem>>, vector<15x64xbf16>
    %cst_6 = arith.constant dense<0.000000e+00> : vector<15x16xf32>
    %6 = tpu.matmul %5, %4, %cst_6 {dimension_numbers = #tpu.dot_dimension_numbers<[1], [1], [0], [0], [0, 0, 1, 0], [], []>} : vector<15x64xbf16>, vector<16x64xbf16>, vector<15x16xf32> -> vector<15x16xf32>
    %cst_7 = arith.constant dense<0xFF800000> : vector<15xf32>
    %7 = vector.multi_reduction <maximumf>, %6, %cst_7 [1] : vector<15x16xf32> to vector<15xf32>
    %8 = vector.shape_cast %7 : vector<15xf32> to vector<15x1xf32>
    %9 = vector.broadcast %8 : vector<15x1xf32> to vector<15x16xf32>
    %10 = arith.subf %6, %9 : vector<15x16xf32>
    %11 = math.exp %10 : vector<15x16xf32>
    %cst_8 = arith.constant dense<0.000000e+00> : vector<15xf32>
    %12 = vector.multi_reduction <add>, %11, %cst_8 [1] : vector<15x16xf32> to vector<15xf32>
    %13 = vector.shape_cast %12 : vector<15xf32> to vector<15x1xf32>
    %14 = tpu.reciprocal %13 {approx = true} : vector<15x1xf32> -> vector<15x1xf32>
    %15 = vector.broadcast %14 : vector<15x1xf32> to vector<15x16xf32>
    %16 = arith.mulf %11, %15 : vector<15x16xf32>
    %17 = arith.truncf %16 : vector<15x16xf32> to vector<15x16xbf16>
    %cst_9 = arith.constant dense<0.000000e+00> : vector<15x64xf32>
    %18 = tpu.matmul %17, %4, %cst_9 {dimension_numbers = #tpu.dot_dimension_numbers<[1], [0], [0], [1], [0, 0, 1, 1], [], []>} : vector<15x16xbf16>, vector<16x64xbf16>, vector<15x64xf32> -> vector<15x64xf32>
    %19 = arith.truncf %18 : vector<15x64xf32> to vector<15x64xbf16>
    %20 = vector.extract_strided_slice %19 {offsets = [0, 0], sizes = [1, 64], strides = [1, 1]} : vector<15x64xbf16> to vector<1x64xbf16>
    %c0_10 = arith.constant 0 : index
    %c0_11 = arith.constant 0 : index
    %c0_12 = arith.constant 0 : index
    %21 = vector.load %arg4[%c0_10, %c0_11, %c0_12] : memref<15x64x128xbf16, #tpu.memory_space<vmem>>, vector<1x64x128xbf16>
    %22 = vector.shape_cast %21 : vector<1x64x128xbf16> to vector<64x128xbf16>
    %cst_13 = arith.constant dense<0.000000e+00> : vector<1x128xf32>
    %23 = tpu.matmul %20, %22, %cst_13 {dimension_numbers = #tpu.dot_dimension_numbers<[1], [0], [0], [1], [0, 0, 1, 1], [], []>} : vector<1x64xbf16>, vector<64x128xbf16>, vector<1x128xf32> -> vector<1x128xf32>
    %24 = vector.extract_strided_slice %19 {offsets = [1, 0], sizes = [1, 64], strides = [1, 1]} : vector<15x64xbf16> to vector<1x64xbf16>
    %c1 = arith.constant 1 : index
    %c0_14 = arith.constant 0 : index
    %c0_15 = arith.constant 0 : index
    %25 = vector.load %arg4[%c1, %c0_14, %c0_15] : memref<15x64x128xbf16, #tpu.memory_space<vmem>>, vector<1x64x128xbf16>
    %26 = vector.shape_cast %25 : vector<1x64x128xbf16> to vector<64x128xbf16>
    %cst_16 = arith.constant dense<0.000000e+00> : vector<1x128xf32>
    %27 = tpu.matmul %24, %26, %cst_16 {dimension_numbers = #tpu.dot_dimension_numbers<[1], [0], [0], [1], [0, 0, 1, 1], [], []>} : vector<1x64xbf16>, vector<64x128xbf16>, vector<1x128xf32> -> vector<1x128xf32>
    %28 = vector.extract_strided_slice %19 {offsets = [2, 0], sizes = [1, 64], strides = [1, 1]} : vector<15x64xbf16> to vector<1x64xbf16>
    %c2 = arith.constant 2 : index
    %c0_17 = arith.constant 0 : index
    %c0_18 = arith.constant 0 : index
    %29 = vector.load %arg4[%c2, %c0_17, %c0_18] : memref<15x64x128xbf16, #tpu.memory_space<vmem>>, vector<1x64x128xbf16>
    %30 = vector.shape_cast %29 : vector<1x64x128xbf16> to vector<64x128xbf16>
    %cst_19 = arith.constant dense<0.000000e+00> : vector<1x128xf32>
    %31 = tpu.matmul %28, %30, %cst_19 {dimension_numbers = #tpu.dot_dimension_numbers<[1], [0], [0], [1], [0, 0, 1, 1], [], []>} : vector<1x64xbf16>, vector<64x128xbf16>, vector<1x128xf32> -> vector<1x128xf32>
    %32 = vector.extract_strided_slice %19 {offsets = [3, 0], sizes = [1, 64], strides = [1, 1]} : vector<15x64xbf16> to vector<1x64xbf16>
    %c3 = arith.constant 3 : index
    %c0_20 = arith.constant 0 : index
    %c0_21 = arith.constant 0 : index
    %33 = vector.load %arg4[%c3, %c0_20, %c0_21] : memref<15x64x128xbf16, #tpu.memory_space<vmem>>, vector<1x64x128xbf16>
    %34 = vector.shape_cast %33 : vector<1x64x128xbf16> to vector<64x128xbf16>
    %cst_22 = arith.constant dense<0.000000e+00> : vector<1x128xf32>
    %35 = tpu.matmul %32, %34, %cst_22 {dimension_numbers = #tpu.dot_dimension_numbers<[1], [0], [0], [1], [0, 0, 1, 1], [], []>} : vector<1x64xbf16>, vector<64x128xbf16>, vector<1x128xf32> -> vector<1x128xf32>
    %36 = vector.extract_strided_slice %19 {offsets = [4, 0], sizes = [1, 64], strides = [1, 1]} : vector<15x64xbf16> to vector<1x64xbf16>
    %c4 = arith.constant 4 : index
    %c0_23 = arith.constant 0 : index
    %c0_24 = arith.constant 0 : index
    %37 = vector.load %arg4[%c4, %c0_23, %c0_24] : memref<15x64x128xbf16, #tpu.memory_space<vmem>>, vector<1x64x128xbf16>
    %38 = vector.shape_cast %37 : vector<1x64x128xbf16> to vector<64x128xbf16>
    %cst_25 = arith.constant dense<0.000000e+00> : vector<1x128xf32>
    %39 = tpu.matmul %36, %38, %cst_25 {dimension_numbers = #tpu.dot_dimension_numbers<[1], [0], [0], [1], [0, 0, 1, 1], [], []>} : vector<1x64xbf16>, vector<64x128xbf16>, vector<1x128xf32> -> vector<1x128xf32>
    %40 = vector.extract_strided_slice %19 {offsets = [5, 0], sizes = [1, 64], strides = [1, 1]} : vector<15x64xbf16> to vector<1x64xbf16>
    %c5 = arith.constant 5 : index
    %c0_26 = arith.constant 0 : index
    %c0_27 = arith.constant 0 : index
    %41 = vector.load %arg4[%c5, %c0_26, %c0_27] : memref<15x64x128xbf16, #tpu.memory_space<vmem>>, vector<1x64x128xbf16>
    %42 = vector.shape_cast %41 : vector<1x64x128xbf16> to vector<64x128xbf16>
    %cst_28 = arith.constant dense<0.000000e+00> : vector<1x128xf32>
    %43 = tpu.matmul %40, %42, %cst_28 {dimension_numbers = #tpu.dot_dimension_numbers<[1], [0], [0], [1], [0, 0, 1, 1], [], []>} : vector<1x64xbf16>, vector<64x128xbf16>, vector<1x128xf32> -> vector<1x128xf32>
    %44 = vector.extract_strided_slice %19 {offsets = [6, 0], sizes = [1, 64], strides = [1, 1]} : vector<15x64xbf16> to vector<1x64xbf16>
    %c6 = arith.constant 6 : index
    %c0_29 = arith.constant 0 : index
    %c0_30 = arith.constant 0 : index
    %45 = vector.load %arg4[%c6, %c0_29, %c0_30] : memref<15x64x128xbf16, #tpu.memory_space<vmem>>, vector<1x64x128xbf16>
    %46 = vector.shape_cast %45 : vector<1x64x128xbf16> to vector<64x128xbf16>
    %cst_31 = arith.constant dense<0.000000e+00> : vector<1x128xf32>
    %47 = tpu.matmul %44, %46, %cst_31 {dimension_numbers = #tpu.dot_dimension_numbers<[1], [0], [0], [1], [0, 0, 1, 1], [], []>} : vector<1x64xbf16>, vector<64x128xbf16>, vector<1x128xf32> -> vector<1x128xf32>
    %48 = vector.extract_strided_slice %19 {offsets = [7, 0], sizes = [1, 64], strides = [1, 1]} : vector<15x64xbf16> to vector<1x64xbf16>
    %c7 = arith.constant 7 : index
    %c0_32 = arith.constant 0 : index
    %c0_33 = arith.constant 0 : index
    %49 = vector.load %arg4[%c7, %c0_32, %c0_33] : memref<15x64x128xbf16, #tpu.memory_space<vmem>>, vector<1x64x128xbf16>
    %50 = vector.shape_cast %49 : vector<1x64x128xbf16> to vector<64x128xbf16>
    %cst_34 = arith.constant dense<0.000000e+00> : vector<1x128xf32>
    %51 = tpu.matmul %48, %50, %cst_34 {dimension_numbers = #tpu.dot_dimension_numbers<[1], [0], [0], [1], [0, 0, 1, 1], [], []>} : vector<1x64xbf16>, vector<64x128xbf16>, vector<1x128xf32> -> vector<1x128xf32>
    %52 = vector.extract_strided_slice %19 {offsets = [8, 0], sizes = [1, 64], strides = [1, 1]} : vector<15x64xbf16> to vector<1x64xbf16>
    %c8 = arith.constant 8 : index
    %c0_35 = arith.constant 0 : index
    %c0_36 = arith.constant 0 : index
    %53 = vector.load %arg4[%c8, %c0_35, %c0_36] : memref<15x64x128xbf16, #tpu.memory_space<vmem>>, vector<1x64x128xbf16>
    %54 = vector.shape_cast %53 : vector<1x64x128xbf16> to vector<64x128xbf16>
    %cst_37 = arith.constant dense<0.000000e+00> : vector<1x128xf32>
    %55 = tpu.matmul %52, %54, %cst_37 {dimension_numbers = #tpu.dot_dimension_numbers<[1], [0], [0], [1], [0, 0, 1, 1], [], []>} : vector<1x64xbf16>, vector<64x128xbf16>, vector<1x128xf32> -> vector<1x128xf32>
    %56 = vector.extract_strided_slice %19 {offsets = [9, 0], sizes = [1, 64], strides = [1, 1]} : vector<15x64xbf16> to vector<1x64xbf16>
    %c9 = arith.constant 9 : index
    %c0_38 = arith.constant 0 : index
    %c0_39 = arith.constant 0 : index
    %57 = vector.load %arg4[%c9, %c0_38, %c0_39] : memref<15x64x128xbf16, #tpu.memory_space<vmem>>, vector<1x64x128xbf16>
    %58 = vector.shape_cast %57 : vector<1x64x128xbf16> to vector<64x128xbf16>
    %cst_40 = arith.constant dense<0.000000e+00> : vector<1x128xf32>
    %59 = tpu.matmul %56, %58, %cst_40 {dimension_numbers = #tpu.dot_dimension_numbers<[1], [0], [0], [1], [0, 0, 1, 1], [], []>} : vector<1x64xbf16>, vector<64x128xbf16>, vector<1x128xf32> -> vector<1x128xf32>
    %60 = vector.extract_strided_slice %19 {offsets = [10, 0], sizes = [1, 64], strides = [1, 1]} : vector<15x64xbf16> to vector<1x64xbf16>
    %c10 = arith.constant 10 : index
    %c0_41 = arith.constant 0 : index
    %c0_42 = arith.constant 0 : index
    %61 = vector.load %arg4[%c10, %c0_41, %c0_42] : memref<15x64x128xbf16, #tpu.memory_space<vmem>>, vector<1x64x128xbf16>
    %62 = vector.shape_cast %61 : vector<1x64x128xbf16> to vector<64x128xbf16>
    %cst_43 = arith.constant dense<0.000000e+00> : vector<1x128xf32>
    %63 = tpu.matmul %60, %62, %cst_43 {dimension_numbers = #tpu.dot_dimension_numbers<[1], [0], [0], [1], [0, 0, 1, 1], [], []>} : vector<1x64xbf16>, vector<64x128xbf16>, vector<1x128xf32> -> vector<1x128xf32>
    %64 = vector.extract_strided_slice %19 {offsets = [11, 0], sizes = [1, 64], strides = [1, 1]} : vector<15x64xbf16> to vector<1x64xbf16>
    %c11 = arith.constant 11 : index
    %c0_44 = arith.constant 0 : index
    %c0_45 = arith.constant 0 : index
    %65 = vector.load %arg4[%c11, %c0_44, %c0_45] : memref<15x64x128xbf16, #tpu.memory_space<vmem>>, vector<1x64x128xbf16>
    %66 = vector.shape_cast %65 : vector<1x64x128xbf16> to vector<64x128xbf16>
    %cst_46 = arith.constant dense<0.000000e+00> : vector<1x128xf32>
    %67 = tpu.matmul %64, %66, %cst_46 {dimension_numbers = #tpu.dot_dimension_numbers<[1], [0], [0], [1], [0, 0, 1, 1], [], []>} : vector<1x64xbf16>, vector<64x128xbf16>, vector<1x128xf32> -> vector<1x128xf32>
    %68 = vector.extract_strided_slice %19 {offsets = [12, 0], sizes = [1, 64], strides = [1, 1]} : vector<15x64xbf16> to vector<1x64xbf16>
    %c12 = arith.constant 12 : index
    %c0_47 = arith.constant 0 : index
    %c0_48 = arith.constant 0 : index
    %69 = vector.load %arg4[%c12, %c0_47, %c0_48] : memref<15x64x128xbf16, #tpu.memory_space<vmem>>, vector<1x64x128xbf16>
    %70 = vector.shape_cast %69 : vector<1x64x128xbf16> to vector<64x128xbf16>
    %cst_49 = arith.constant dense<0.000000e+00> : vector<1x128xf32>
    %71 = tpu.matmul %68, %70, %cst_49 {dimension_numbers = #tpu.dot_dimension_numbers<[1], [0], [0], [1], [0, 0, 1, 1], [], []>} : vector<1x64xbf16>, vector<64x128xbf16>, vector<1x128xf32> -> vector<1x128xf32>
    %72 = vector.extract_strided_slice %19 {offsets = [13, 0], sizes = [1, 64], strides = [1, 1]} : vector<15x64xbf16> to vector<1x64xbf16>
    %c13 = arith.constant 13 : index
    %c0_50 = arith.constant 0 : index
    %c0_51 = arith.constant 0 : index
    %73 = vector.load %arg4[%c13, %c0_50, %c0_51] : memref<15x64x128xbf16, #tpu.memory_space<vmem>>, vector<1x64x128xbf16>
    %74 = vector.shape_cast %73 : vector<1x64x128xbf16> to vector<64x128xbf16>
    %cst_52 = arith.constant dense<0.000000e+00> : vector<1x128xf32>
    %75 = tpu.matmul %72, %74, %cst_52 {dimension_numbers = #tpu.dot_dimension_numbers<[1], [0], [0], [1], [0, 0, 1, 1], [], []>} : vector<1x64xbf16>, vector<64x128xbf16>, vector<1x128xf32> -> vector<1x128xf32>
    %76 = vector.extract_strided_slice %19 {offsets = [14, 0], sizes = [1, 64], strides = [1, 1]} : vector<15x64xbf16> to vector<1x64xbf16>
    %c14 = arith.constant 14 : index
    %c0_53 = arith.constant 0 : index
    %c0_54 = arith.constant 0 : index
    %77 = vector.load %arg4[%c14, %c0_53, %c0_54] : memref<15x64x128xbf16, #tpu.memory_space<vmem>>, vector<1x64x128xbf16>
    %78 = vector.shape_cast %77 : vector<1x64x128xbf16> to vector<64x128xbf16>
    %cst_55 = arith.constant dense<0.000000e+00> : vector<1x128xf32>
    %79 = tpu.matmul %76, %78, %cst_55 {dimension_numbers = #tpu.dot_dimension_numbers<[1], [0], [0], [1], [0, 0, 1, 1], [], []>} : vector<1x64xbf16>, vector<64x128xbf16>, vector<1x128xf32> -> vector<1x128xf32>
    %c0_56 = arith.constant 0 : index
    %c0_57 = arith.constant 0 : index
    %80 = vector.load %arg5[%c0_56, %c0_57] : memref<1x128xf32, #tpu.memory_space<vmem>>, vector<1x128xf32>
    %81 = arith.addf %80, %23 : vector<1x128xf32>
    %82 = arith.addf %81, %27 : vector<1x128xf32>
    %83 = arith.addf %82, %31 : vector<1x128xf32>
    %84 = arith.addf %83, %35 : vector<1x128xf32>
    %85 = arith.addf %84, %39 : vector<1x128xf32>
    %86 = arith.addf %85, %43 : vector<1x128xf32>
    %87 = arith.addf %86, %47 : vector<1x128xf32>
    %88 = arith.addf %87, %51 : vector<1x128xf32>
    %89 = arith.addf %88, %55 : vector<1x128xf32>
    %90 = arith.addf %89, %59 : vector<1x128xf32>
    %91 = arith.addf %90, %63 : vector<1x128xf32>
    %92 = arith.addf %91, %67 : vector<1x128xf32>
    %93 = arith.addf %92, %71 : vector<1x128xf32>
    %94 = arith.addf %93, %75 : vector<1x128xf32>
    %95 = arith.addf %94, %79 : vector<1x128xf32>
    %cst_58 = arith.constant 0.000000e+00 : f32
    %96 = vector.broadcast %cst_58 : f32 to vector<1x128xf32>
    %97 = arith.maximumf %95, %96 : vector<1x128xf32>
    %98 = arith.truncf %97 : vector<1x128xf32> to vector<1x128xbf16>
    %c0_59 = arith.constant 0 : index
    %c0_60 = arith.constant 0 : index
    %99 = vector.load %arg6[%c0_59, %c0_60] : memref<128x128xbf16, #tpu.memory_space<vmem>>, vector<128x128xbf16>
    %cst_61 = arith.constant dense<0.000000e+00> : vector<1x128xf32>
    %100 = tpu.matmul %98, %99, %cst_61 {dimension_numbers = #tpu.dot_dimension_numbers<[1], [0], [0], [1], [0, 0, 1, 1], [], []>} : vector<1x128xbf16>, vector<128x128xbf16>, vector<1x128xf32> -> vector<1x128xf32>
    %c0_62 = arith.constant 0 : index
    %c0_63 = arith.constant 0 : index
    %101 = vector.load %arg7[%c0_62, %c0_63] : memref<1x128xf32, #tpu.memory_space<vmem>>, vector<1x128xf32>
    %102 = arith.addf %100, %101 : vector<1x128xf32>
    %103 = vector.shape_cast %102 : vector<1x128xf32> to vector<1x128xf32>
    %104 = vector.broadcast %103 : vector<1x128xf32> to vector<8x128xf32>
    %c0_64 = arith.constant 0 : index
    %c0_65 = arith.constant 0 : index
    %c0_66 = arith.constant 0 : index
    %105 = vector.load %arg8[%c0_64, %c0_65, %c0_66] : memref<1x8x128xf32, #tpu.memory_space<vmem>>, vector<1x8x128xf32>
    %106 = vector.shape_cast %105 : vector<1x8x128xf32> to vector<8x128xf32>
    %107 = vector.shape_cast %104 : vector<8x128xf32> to vector<1x8x128xf32>
    tpu.vector_store %arg8[%c0_64, %c0_65, %c0_66], %107 {strides = array<i32>} : memref<1x8x128xf32, #tpu.memory_space<vmem>>, vector<1x8x128xf32>,
    return
  }
  func.func @transform_0(%arg0: i32) -> (i32, i32) {
    %c0_i32 = arith.constant 0 : i32
    %c0_i32_0 = arith.constant 0 : i32
    %c0_i32_1 = arith.constant 0 : i32
    return %c0_i32, %c0_i32_0 : i32, i32
  }
  func.func @transform_1(%arg0: i32) -> (i32, i32, i32) {
    %c0_i32 = arith.constant 0 : i32
    %c0_i32_0 = arith.constant 0 : i32
    %c0_i32_1 = arith.constant 0 : i32
    return %arg0, %c0_i32, %c0_i32_0 : i32, i32, i32
  }
  func.func @transform_2(%arg0: i32) -> (i32, i32) {
    %c0_i32 = arith.constant 0 : i32
    %c0_i32_0 = arith.constant 0 : i32
    %c0_i32_1 = arith.constant 0 : i32
    return %c0_i32, %c0_i32_0 : i32, i32
  }
  func.func @transform_3(%arg0: i32) -> (i32, i32, i32) {
    %c0_i32 = arith.constant 0 : i32
    %c0_i32_0 = arith.constant 0 : i32
    %c0_i32_1 = arith.constant 0 : i32
    %c0_i32_2 = arith.constant 0 : i32
    return %c0_i32, %c0_i32_0, %c0_i32_1 : i32, i32, i32
  }
  func.func @transform_4(%arg0: i32) -> (i32, i32) {
    %c0_i32 = arith.constant 0 : i32
    %c0_i32_0 = arith.constant 0 : i32
    %c0_i32_1 = arith.constant 0 : i32
    return %c0_i32, %c0_i32_0 : i32, i32
  }
  func.func @transform_5(%arg0: i32) -> (i32, i32) {
    %c0_i32 = arith.constant 0 : i32
    %c0_i32_0 = arith.constant 0 : i32
    %c0_i32_1 = arith.constant 0 : i32
    return %c0_i32, %c0_i32_0 : i32, i32
  }
  func.func @transform_6(%arg0: i32) -> (i32, i32) {
    %c0_i32 = arith.constant 0 : i32
    %c0_i32_0 = arith.constant 0 : i32
    %c0_i32_1 = arith.constant 0 : i32
    return %c0_i32, %c0_i32_0 : i32, i32
  }
  func.func @transform_7(%arg0: i32) -> (i32, i32, i32) {
    %c0_i32 = arith.constant 0 : i32
    %c0_i32_0 = arith.constant 0 : i32
    %c0_i32_1 = arith.constant 0 : i32
    return %arg0, %c0_i32, %c0_i32_0 : i32, i32, i32
  }
}

</mosaic_0001>

<llo_original>
// kernel: tpu_custom_call.1
$region0: #{tpu_custom_call.1}
  #allocation0 [shape = 'u32[]', space=smem, size = 0x4, offset = 0x4, fixed_abs, tag = 'smem constant byte address 0x4 - core index']
  #allocation1 [shape = 'u32[144,128]{1,0:T(1,128)}', space=vmem, size = 0x12000, scoped, tag = 'internal scratch']
  %s0 = inlined_call_operand.hbm [shape: bf16[15,64], index: 0, kind: input, shape index: {}]
  %s1 = inlined_call_operand.hbm [shape: bf16[2,16,32], index: 1, kind: input, shape index: {}]
  %s2 = inlined_call_operand.hbm [shape: bf16[32,64], index: 2, kind: input, shape index: {}]
  %s3 = inlined_call_operand.hbm [shape: bf16[15,64,128], index: 3, kind: input, shape index: {}]
  %s4 = inlined_call_operand.vmem [shape: f32[1,128], index: 4, kind: input, shape index: {}]
  %s5 = inlined_call_operand.hbm [shape: bf16[128,128], index: 5, kind: input, shape index: {}]
  %s6 = inlined_call_operand.vmem [shape: f32[1,128], index: 6, kind: input, shape index: {}]
  %s7 = inlined_call_operand.hbm [shape: f32[2,8,128], index: 7, kind: output, shape index: {}]
  %s8 = sld [smem:[#allocation0]]
  $region81: #{tpu_custom_call.1} parent=0
    _
  %s10 = ssub.s32 1, %s8
  %s11 = scalar_select 0, %s10, %s8
  $region1: #{tpu_custom_call.1} parent=0
    #allocation2 [shape = 'u8[4096]{0}', space=vmem, size = 0x1000, scoped, tag = 'input window, operand 0, single buffered']
    #allocation3 [shape = 's32[2]{0}', space=sflag, size = 0x8, scoped, tag = 'scoped memory for tpu_custom_call.1']
    #allocation4 [shape = 's32[2]{0}', space=sflag, size = 0x8, scoped, tag = 'scoped memory for tpu_custom_call.1']
    #allocation5 [shape = 'u8[8192]{0}', space=vmem, size = 0x2000, scoped, tag = 'input window, operand 1']
    #allocation6 [shape = 's32[2]{0}', space=sflag, size = 0x8, scoped, tag = 'scoped memory for tpu_custom_call.1']
    #allocation7 [shape = 'u8[8192]{0}', space=vmem, size = 0x2000, scoped, tag = 'input window, operand 2, single buffered']
    #allocation8 [shape = 'u8[245760]{0}', space=vmem, size = 0x3c000, scoped, tag = 'input window, operand 3, single buffered']
    #allocation9 [shape = 's32[1]{0}', space=sflag, size = 0x4, scoped, tag = 'scoped memory for tpu_custom_call.1']
    #allocation10 [shape = 'u8[32768]{0}', space=vmem, size = 0x8000, scoped, tag = 'input window, operand 5, single buffered']
    #allocation11 [shape = 'u8[8192]{0}', space=vmem, size = 0x2000, scoped, tag = 'output window, operand 0']
    %12 = vsyncpa [#allocation3], 0
    %13 = vsyncpa [#allocation6], 0
    %s14 = scalar_lea.sflag [#allocation6], 1
    %15 = vsyncpa %s14, 0
    %16 = vsyncpa [#allocation9], 0
    %17 = vsyncpa [#allocation4], 0
    %s18 = scalar_lea.sflag [#allocation4], 1
    %19 = vsyncpa %s18, 0
    loop: start=0, step=1, limit=4
    $region2: #{tpu_custom_call.1} parent=1 // loop_pre_header
      _
    $region3: #{tpu_custom_call.1} parent=1 // loop_header
      %s21 = sphi 0, %s25
      %p22 = scmp.ge.s32.totalorder %s21, 4
      %s29 = sphi 0, %s29
      %s31 = sphi 0, %s29
      %s32 = sphi 0, %s31
      %s46 = sphi 0, %s32
      %s52 = sphi 0, %s54
      %s55 = sphi 0, %s52
      %s56 = sphi 0, %s55
      %s72 = sphi 0, %s56
      %s76 = sphi 0, %s76
      %s78 = sphi 0, %s76
      %s79 = sphi 0, %s78
      %s93 = sphi 0, %s79
      %s97 = sphi 0, %s97
      %s99 = sphi 0, %s97
      %s100 = sphi 0, %s99
      %s114 = sphi 0, %s100
      %s118 = sphi 0, %s118
      %s120 = sphi 0, %s118
      %s121 = sphi 0, %s120
      %s135 = sphi 0, %s121
      %s139 = sphi 0, %s139
      %s141 = sphi 0, %s139
      %s142 = sphi 0, %s141
      %s156 = sphi 0, %s142
      %s160 = sphi 0, %s160
      %s162 = sphi 0, %s160
      %s163 = sphi 0, %s162
      %s177 = sphi 0, %s163
      %s183 = sphi 0, %s185
      %s186 = sphi 0, %s183
      %s187 = sphi 0, %s186
      %s203 = sphi 0, %s187
    $region4: #{tpu_custom_call.1} parent=1 // loop_header_branch
      %24 = sbr.rel (%p22) target = $region8
    $region5: #{tpu_custom_call.1} parent=1 // loop_body
      %s26 = ssub.s32 %s21, 1
      %s27 = ssub.s32 %s21, 2
      %s28 = sadd.s32 %s21, 1
      %s30 = sadd.s32 %s29, 1
      %p33 = scmp.eq.s32.totalorder %s21, 1
      %p34 = scmp.ne.s32.totalorder %s29, %s31
      %p35 = scmp.eq.s32.totalorder %s21, 0
      %p36 = por %p34, %p35
      %p37 = scmp.ne.s32.totalorder %s29, %s31
      %p38 = scmp.eq.s32.totalorder %s26, 1
      %p39 = por %p37, %p38
      %p40 = scmp.ne.s32.totalorder %s31, %s32
      %p41 = scmp.eq.s32.totalorder %s26, 0
      %p42 = por %p40, %p41
      %p43 = scmp.ne.s32.totalorder %s31, %s32
      %p44 = scmp.eq.s32.totalorder %s27, 1
      %p45 = por %p43, %p44
      %p47 = scmp.ne.s32.totalorder %s32, %s46
      %p48 = scmp.eq.s32.totalorder %s27, 0
      %p49 = por %p47, %p48
      %s50 = ssub.s32 %s21, %s28
      %p51 = scmp.eq.s32.totalorder %s50, 0
      %s53 = sadd.s32 %s52, 1
      %s54 = scalar_select %p51, %s52, %s53
      %p57 = pneg %p51
      %p58 = scmp.eq.s32.totalorder %s21, 1
      %p59 = por %p57, %p58
      %p60 = scmp.ne.s32.totalorder %s52, %s55
      %p61 = scmp.eq.s32.totalorder %s21, 0
      %p62 = por %p60, %p61
      %p63 = scmp.ne.s32.totalorder %s52, %s55
      %p64 = scmp.eq.s32.totalorder %s26, 1
      %p65 = por %p63, %p64
      %p66 = scmp.ne.s32.totalorder %s55, %s56
      %p67 = scmp.eq.s32.totalorder %s26, 0
      %p68 = por %p66, %p67
      %p69 = scmp.ne.s32.totalorder %s55, %s56
      %p70 = scmp.eq.s32.totalorder %s27, 1
      %p71 = por %p69, %p70
      %p73 = scmp.ne.s32.totalorder %s56, %s72
      %p74 = scmp.eq.s32.totalorder %s27, 0
      %p75 = por %p73, %p74
      %s77 = sadd.s32 %s76, 1
      %p80 = scmp.eq.s32.totalorder %s21, 1
      %p81 = scmp.ne.s32.totalorder %s76, %s78
      %p82 = scmp.eq.s32.totalorder %s21, 0
      %p83 = por %p81, %p82
      %p84 = scmp.ne.s32.totalorder %s76, %s78
      %p85 = scmp.eq.s32.totalorder %s26, 1
      %p86 = por %p84, %p85
      %p87 = scmp.ne.s32.totalorder %s78, %s79
      %p88 = scmp.eq.s32.totalorder %s26, 0
      %p89 = por %p87, %p88
      %p90 = scmp.ne.s32.totalorder %s78, %s79
      %p91 = scmp.eq.s32.totalorder %s27, 1
      %p92 = por %p90, %p91
      %p94 = scmp.ne.s32.totalorder %s79, %s93
      %p95 = scmp.eq.s32.totalorder %s27, 0
      %p96 = por %p94, %p95
      %s98 = sadd.s32 %s97, 1
      %p101 = scmp.eq.s32.totalorder %s21, 1
      %p102 = scmp.ne.s32.totalorder %s97, %s99
      %p103 = scmp.eq.s32.totalorder %s21, 0
      %p104 = por %p102, %p103
      %p105 = scmp.ne.s32.totalorder %s97, %s99
      %p106 = scmp.eq.s32.totalorder %s26, 1
      %p107 = por %p105, %p106
      %p108 = scmp.ne.s32.totalorder %s99, %s100
      %p109 = scmp.eq.s32.totalorder %s26, 0
      %p110 = por %p108, %p109
      %p111 = scmp.ne.s32.totalorder %s99, %s100
      %p112 = scmp.eq.s32.totalorder %s27, 1
      %p113 = por %p111, %p112
      %p115 = scmp.ne.s32.totalorder %s100, %s114
      %p116 = scmp.eq.s32.totalorder %s27, 0
      %p117 = por %p115, %p116
      %s119 = sadd.s32 %s118, 1
      %p122 = scmp.eq.s32.totalorder %s21, 1
      %p123 = scmp.ne.s32.totalorder %s118, %s120
      %p124 = scmp.eq.s32.totalorder %s21, 0
      %p125 = por %p123, %p124
      %p126 = scmp.ne.s32.totalorder %s118, %s120
      %p127 = scmp.eq.s32.totalorder %s26, 1
      %p128 = por %p126, %p127
      %p129 = scmp.ne.s32.totalorder %s120, %s121
      %p130 = scmp.eq.s32.totalorder %s26, 0
      %p131 = por %p129, %p130
      %p132 = scmp.ne.s32.totalorder %s120, %s121
      %p133 = scmp.eq.s32.totalorder %s27, 1
      %p134 = por %p132, %p133
      %p136 = scmp.ne.s32.totalorder %s121, %s135
      %p137 = scmp.eq.s32.totalorder %s27, 0
      %p138 = por %p136, %p137
      %s140 = sadd.s32 %s139, 1
      %p143 = scmp.eq.s32.totalorder %s21, 1
      %p144 = scmp.ne.s32.totalorder %s139, %s141
      %p145 = scmp.eq.s32.totalorder %s21, 0
      %p146 = por %p144, %p145
      %p147 = scmp.ne.s32.totalorder %s139, %s141
      %p148 = scmp.eq.s32.totalorder %s26, 1
      %p149 = por %p147, %p148
      %p150 = scmp.ne.s32.totalorder %s141, %s142
      %p151 = scmp.eq.s32.totalorder %s26, 0
      %p152 = por %p150, %p151
      %p153 = scmp.ne.s32.totalorder %s141, %s142
      %p154 = scmp.eq.s32.totalorder %s27, 1
      %p155 = por %p153, %p154
      %p157 = scmp.ne.s32.totalorder %s142, %s156
      %p158 = scmp.eq.s32.totalorder %s27, 0
      %p159 = por %p157, %p158
      %s161 = sadd.s32 %s160, 1
      %p164 = scmp.eq.s32.totalorder %s21, 1
      %p165 = scmp.ne.s32.totalorder %s160, %s162
      %p166 = scmp.eq.s32.totalorder %s21, 0
      %p167 = por %p165, %p166
      %p168 = scmp.ne.s32.totalorder %s160, %s162
      %p169 = scmp.eq.s32.totalorder %s26, 1
      %p170 = por %p168, %p169
      %p171 = scmp.ne.s32.totalorder %s162, %s163
      %p172 = scmp.eq.s32.totalorder %s26, 0
      %p173 = por %p171, %p172
      %p174 = scmp.ne.s32.totalorder %s162, %s163
      %p175 = scmp.eq.s32.totalorder %s27, 1
      %p176 = por %p174, %p175
      %p178 = scmp.ne.s32.totalorder %s163, %s177
      %p179 = scmp.eq.s32.totalorder %s27, 0
      %p180 = por %p178, %p179
      %s181 = ssub.s32 %s21, %s28
      %p182 = scmp.eq.s32.totalorder %s181, 0
      %s184 = sadd.s32 %s183, 1
      %s185 = scalar_select %p182, %s183, %s184
      %p188 = pneg %p182
      %p189 = scmp.eq.s32.totalorder %s21, 1
      %p190 = por %p188, %p189
      %p191 = scmp.ne.s32.totalorder %s183, %s186
      %p192 = scmp.eq.s32.totalorder %s21, 0
      %p193 = por %p191, %p192
      %p194 = scmp.ne.s32.totalorder %s183, %s186
      %p195 = scmp.eq.s32.totalorder %s26, 1
      %p196 = por %p194, %p195
      %p197 = scmp.ne.s32.totalorder %s186, %s187
      %p198 = scmp.eq.s32.totalorder %s26, 0
      %p199 = por %p197, %p198
      %p200 = scmp.ne.s32.totalorder %s186, %s187
      %p201 = scmp.eq.s32.totalorder %s27, 1
      %p202 = por %p200, %p201
      %p204 = scmp.ne.s32.totalorder %s187, %s203
      %p205 = scmp.eq.s32.totalorder %s27, 0
      %p206 = por %p204, %p205
      %p207 = scmp.le.s32.totalorder 1, %s21
      %p208 = scmp.lt.s32.totalorder %s21, 3
      %p209 = pnand %p207, %p208
      %p210 = pneg %p209
      // Predicated region
      $region9: #{tpu_custom_call.1} parent=5 // pred_check
        _
      $region10: #{tpu_custom_call.1} parent=5 // pred_check_branch
        %212 = sbr.rel (%p209) target = $region12
      $region11: #{tpu_custom_call.1} parent=5 // pred_region
        %s213 = ssub.s32 %s21, 1
        // Predicated region
        $region13: #{tpu_custom_call.1} parent=11 // pred_check
          %p214 = pneg %p42
        $region14: #{tpu_custom_call.1} parent=11 // pred_check_branch
          %216 = sbr.rel (%p214) target = $region16
        $region15: #{tpu_custom_call.1} parent=11 // pred_region
          %s218 = ssub.s32 128, 128
          %219 = vsyncadd [#allocation3], %s218
          %s220 = sshll.u32 [#allocation2], 4
          %s221 = int_to_ptr.vmem [resolvable:$true] %s220
          %226 = dma.hbm_to_vmem [thread:$0]  %s0, 128, %s221, [#allocation3], 64, 64, 4
        $region16: #{tpu_custom_call.1} parent=11 // pred_fallthru
          _
        // Predicated region
        $region17: #{tpu_custom_call.1} parent=11 // pred_check
          %p227 = pneg %p89
        $region18: #{tpu_custom_call.1} parent=11 // pred_check_branch
          %229 = sbr.rel (%p227) target = $region20
        $region19: #{tpu_custom_call.1} parent=11 // pred_region
          %s231 = ssub.s32 256, 256
          %232 = vsyncadd [#allocation6], %s231
          %s233 = sshll.u32 [#allocation7], 4
          %s234 = int_to_ptr.vmem [resolvable:$true] %s233
          %239 = dma.hbm_to_vmem [thread:$0]  %s2, 256, %s234, [#allocation6], 64, 64, 4
        $region20: #{tpu_custom_call.1} parent=11 // pred_fallthru
          _
        // Predicated region
        $region21: #{tpu_custom_call.1} parent=11 // pred_check
          %p240 = pneg %p110
        $region22: #{tpu_custom_call.1} parent=11 // pred_check_branch
          %242 = sbr.rel (%p240) target = $region24
        $region23: #{tpu_custom_call.1} parent=11 // pred_region
          %s244 = ssub.s32 7680, 7680
          %245 = vsyncadd [#allocation9], %s244
          %s246 = sshll.u32 [#allocation8], 4
          %s247 = int_to_ptr.vmem [resolvable:$true] %s246
          %252 = dma.hbm_to_vmem [thread:$0]  %s3, 7680, %s247, [#allocation9], 64, 64, 4
        $region24: #{tpu_custom_call.1} parent=11 // pred_fallthru
          _
        // Predicated region
        $region25: #{tpu_custom_call.1} parent=11 // pred_check
          %p253 = pneg %p131
        $region26: #{tpu_custom_call.1} parent=11 // pred_check_branch
          %255 = sbr.rel (%p253) target = $region28
        $region27: #{tpu_custom_call.1} parent=11 // pred_region
          _
        $region28: #{tpu_custom_call.1} parent=11 // pred_fallthru
          _
        // Predicated region
        $region29: #{tpu_custom_call.1} parent=11 // pred_check
          %p256 = pneg %p152
        $region30: #{tpu_custom_call.1} parent=11 // pred_check_branch
          %258 = sbr.rel (%p256) target = $region32
        $region31: #{tpu_custom_call.1} parent=11 // pred_region
          %s260 = ssub.s32 1024, 1024
          %261 = vsyncadd [#allocation9], %s260
          %s262 = sshll.u32 [#allocation10], 4
          %s263 = int_to_ptr.vmem [resolvable:$true] %s262
          %268 = dma.hbm_to_vmem [thread:$0]  %s5, 1024, %s263, [#allocation9], 64, 64, 4
        $region32: #{tpu_custom_call.1} parent=11 // pred_fallthru
          _
        // Predicated region
        $region33: #{tpu_custom_call.1} parent=11 // pred_check
          %p269 = pneg %p173
        $region34: #{tpu_custom_call.1} parent=11 // pred_check_branch
          %271 = sbr.rel (%p269) target = $region36
        $region35: #{tpu_custom_call.1} parent=11 // pred_region
          _
        $region36: #{tpu_custom_call.1} parent=11 // pred_fallthru
          _
      $region12: #{tpu_custom_call.1} parent=5 // pred_fallthru
        _
      %p272 = scmp.lt.s32.totalorder %s21, 2
      // Predicated region
      $region37: #{tpu_custom_call.1} parent=5 // pred_check
        %p273 = pneg %p272
      $region38: #{tpu_custom_call.1} parent=5 // pred_check_branch
        %275 = sbr.rel (%p273) target = $region40
      $region39: #{tpu_custom_call.1} parent=5 // pred_region
        // Predicated region
        $region41: #{tpu_custom_call.1} parent=39 // pred_check
          %p276 = pneg %p62
        $region42: #{tpu_custom_call.1} parent=39 // pred_check_branch
          %278 = sbr.rel (%p276) target = $region44
        $region43: #{tpu_custom_call.1} parent=39 // pred_region
          %s279 = sand.u32 %s21, 1
          %s280 = scalar_lea.sflag [#allocation6], %s279
          %s281 = sand.u32 %s52, 1
          %s282 = smul.addr %s281, 8
          %s283 = scalar_lea.vmem [#allocation5], %s282
          %s285 = ssub.s32 128, 128
          %286 = vsyncadd %s280, %s285
          %s287 = smul.addr %s21, 2
          %s288 = smul.addr %s287, 64
          %s289 = scalar_lea.hbm %s1, %s288
          %s290 = sshll.u32 %s283, 4
          %s291 = int_to_ptr.vmem [resolvable:$true] %s290
          %296 = dma.hbm_to_vmem [thread:$0]  %s289, 128, %s291, %s280, 64, 64, 4
        $region44: #{tpu_custom_call.1} parent=39 // pred_fallthru
          _
      $region40: #{tpu_custom_call.1} parent=5 // pred_fallthru
        _
      %p297 = scmp.le.s32.totalorder 1, %s21
      %p298 = scmp.lt.s32.totalorder %s21, 3
      %p299 = pnand %p297, %p298
      %p300 = pneg %p299
      // Predicated region
      $region45: #{tpu_custom_call.1} parent=5 // pred_check
        _
      $region46: #{tpu_custom_call.1} parent=5 // pred_check_branch
        %302 = sbr.rel (%p299) target = $region48
      $region47: #{tpu_custom_call.1} parent=5 // pred_region
        %s303 = ssub.s32 %s21, 1
        // Predicated region
        $region49: #{tpu_custom_call.1} parent=47 // pred_check
          %p304 = pneg %p42
        $region50: #{tpu_custom_call.1} parent=47 // pred_check_branch
          %306 = sbr.rel (%p304) target = $region52
        $region51: #{tpu_custom_call.1} parent=47 // pred_region
          %307 = dma.done [#allocation3], 128
        $region52: #{tpu_custom_call.1} parent=47 // pred_fallthru
          _
        %s308 = sand.u32 %s26, 1
        %s309 = scalar_lea.sflag [#allocation6], %s308
        %s310 = sand.u32 %s55, 1
        %s311 = smul.addr %s310, 8
        %s312 = scalar_lea.vmem [#allocation5], %s311
        // Predicated region
        $region53: #{tpu_custom_call.1} parent=47 // pred_check
          %p313 = pneg %p68
        $region54: #{tpu_custom_call.1} parent=47 // pred_check_branch
          %315 = sbr.rel (%p313) target = $region56
        $region55: #{tpu_custom_call.1} parent=47 // pred_region
          %316 = dma.done %s309, 128
        $region56: #{tpu_custom_call.1} parent=47 // pred_fallthru
          _
        // Predicated region
        $region57: #{tpu_custom_call.1} parent=47 // pred_check
          %p317 = pneg %p89
        $region58: #{tpu_custom_call.1} parent=47 // pred_check_branch
          %319 = sbr.rel (%p317) target = $region60
        $region59: #{tpu_custom_call.1} parent=47 // pred_region
          %320 = dma.done [#allocation6], 256
        $region60: #{tpu_custom_call.1} parent=47 // pred_fallthru
          _
        // Predicated region
        $region61: #{tpu_custom_call.1} parent=47 // pred_check
          %p321 = pneg %p110
        $region62: #{tpu_custom_call.1} parent=47 // pred_check_branch
          %323 = sbr.rel (%p321) target = $region64
        $region63: #{tpu_custom_call.1} parent=47 // pred_region
          %324 = dma.done [#allocation9], 7680
        $region64: #{tpu_custom_call.1} parent=47 // pred_fallthru
          _
        // Predicated region
        $region65: #{tpu_custom_call.1} parent=47 // pred_check
          %p325 = pneg %p152
        $region66: #{tpu_custom_call.1} parent=47 // pred_check_branch
          %327 = sbr.rel (%p325) target = $region68
        $region67: #{tpu_custom_call.1} parent=47 // pred_region
          %328 = dma.done [#allocation9], 1024
        $region68: #{tpu_custom_call.1} parent=47 // pred_fallthru
          _
        %p329 = pneg %p42
        %p330 = pneg %p39
        %s331 = sand.u32 %s26, 1
        %s332 = scalar_lea.sflag [#allocation6], %s331
        %s333 = sand.u32 %s55, 1
        %s334 = smul.addr %s333, 8
        %s335 = scalar_lea.vmem [#allocation5], %s334
        %p336 = pneg %p68
        %p337 = pneg %p65
        %p338 = pneg %p89
        %p339 = pneg %p86
        %p340 = pneg %p110
        %p341 = pneg %p107
        %p342 = pneg %p131
        %p343 = pneg %p128
        %p344 = pneg %p152
        %p345 = pneg %p149
        %p346 = pneg %p173
        %p347 = pneg %p170
        %p348 = pneg %p199
        %p349 = pneg %p196
        %s350 = sand.u32 %s186, 1
        %s351 = scalar_lea.sflag [#allocation4], %s350
        %s352 = sand.u32 %s186, 1
        %s353 = smul.addr %s352, 8
        %s354 = scalar_lea.vmem [#allocation11], %s353
        %v356 = vld [vmem:[%s312] sm:$0xf]
        %v357 = vld [vmem:[%s312 + $0x4] sm:$0xf]
        %v358 = vld [vmem:[#allocation7] sm:$0xf]
        %v359 = vld [vmem:[#allocation7 + $0x4] sm:$0xf]
        %v360 = vld [vmem:[#allocation7 + $0x8] sm:$0xf]
        %v361 = vld [vmem:[#allocation7 + $0xc] sm:$0xf]
        %v364 = vunpack.c.l.b16 %v356
        %v365 = vunpack.c.l.b16 %v357
        %v366 = vpack.c.b16 %v365, %v364
        %v371 = vunpack.c.l.b16 %v358
        %v372 = vunpack.c.l.b16 %v359
        %v373 = vunpack.c.l.b16 %v360
        %v374 = vunpack.c.l.b16 %v361
        %v375 = vpack.c.b16 %v372, %v371
        %v376 = vpack.c.b16 %v374, %v373
        %vm379 = vcmask 261120
        %v381 = vsel %vm379, %v366, 0
        %383 = vmatprep.subr.bf16.mxu0 0
        %384 = vmatpush1.bf16.msra.mxu0 0
        %385 = vmatprep.subr.bf16.mxu0 0
        %386 = vmatpush1.bf16.msra.mxu0 0
        %387 = vmatprep.subr.bf16.mxu0 0
        %388 = vmatpush1.bf16.msra.mxu0 0
        %389 = vmatprep.subr.bf16.mxu0 0
        %390 = vmatpush1.bf16.msra.mxu0 0
        %391 = vmatprep.subr.bf16.mxu0 0
        %392 = vmatpush1.bf16.msra.mxu0 0
        %393 = vmatprep.subr.bf16.mxu0 0
        %394 = vmatpush1.bf16.msra.mxu0 0
        %395 = vmatprep.subr.bf16.mxu0 0
        %396 = vmatpush1.bf16.msra.mxu0 %v376
        %397 = vmatprep.subr.bf16.mxu0 0
        %398 = vmatpush1.bf16.msra.mxu0 %v375
        %399 = vmatprep.subr.bf16.mxu0 0
        %400 = vmatpush2.bf16.msra.mxu0 0
        %401 = vmatprep.subr.bf16.mxu0 0
        %402 = vmatpush2.bf16.msra.mxu0 0
        %403 = vmatprep.subr.bf16.mxu0 0
        %404 = vmatpush2.bf16.msra.mxu0 0
        %405 = vmatprep.subr.bf16.mxu0 0
        %406 = vmatpush2.bf16.msra.mxu0 0
        %407 = vmatprep.subr.bf16.mxu0 0
        %408 = vmatpush2.bf16.msra.mxu0 0
        %409 = vmatprep.subr.bf16.mxu0 0
        %410 = vmatpush2.bf16.msra.mxu0 0
        %411 = vmatprep.subr.bf16.mxu0 0
        %412 = vmatpush2.bf16.msra.mxu0 0
        %413 = vmatprep.subr.bf16.mxu0 0
        %414 = vmatpush2.bf16.msra.mxu0 0
        %415 = vmatprep.mubr.bf16.mxu0 0
        %416 = vmatmul.mubr.bf16.gmra.mxu0 %v381
        %v417 = vpop.f32.mrf.mxu0
        %v418 = vadd.f32 0.0, %v417
        %v419 = vpop.f32.mrf.mxu0
        %v420 = vpop.f32.mrf.mxu0
        %v421 = vadd.f32 0.0, %v420
        %v422 = vpop.f32.mrf.mxu0
        %423 = vdwg.mxu0
        %v424 = vpack.c.bf16 %v421, %v418
        %v425 = vld [vmem:[#allocation2] sm:$0xf]
        %v426 = vld [vmem:[#allocation2 + $0x4] sm:$0xf]
        %v429 = vunpack.c.l.b16 %v425
        %v430 = vunpack.c.l.b16 %v426
        %v431 = vpack.c.b16 %v430, %v429
        %vm432 = vcmask 523264
        %v434 = vsel %vm432, %v431, 0
        %v437 = vsel %vm432, %v424, 0
        %439 = vmatprep.subr.bf16.mxu0 0
        %440 = vmatpush1.bf16.xpose.msra.mxu0 0
        %441 = vmatprep.subr.bf16.mxu0 0
        %442 = vmatpush1.bf16.xpose.msra.mxu0 0
        %443 = vmatprep.subr.bf16.mxu0 0
        %444 = vmatpush1.bf16.xpose.msra.mxu0 0
        %445 = vmatprep.subr.bf16.mxu0 0
        %446 = vmatpush1.bf16.xpose.msra.mxu0 0
        %447 = vmatprep.subr.bf16.mxu0 0
        %448 = vmatpush1.bf16.xpose.msra.mxu0 0
        %449 = vmatprep.subr.bf16.mxu0 0
        %450 = vmatpush1.bf16.xpose.msra.mxu0 0
        %451 = vmatprep.subr.bf16.mxu0 0
        %452 = vmatpush1.bf16.xpose.msra.mxu0 0
        %453 = vmatprep.subr.bf16.mxu0 0
        %454 = vmatpush1.bf16.xpose.msra.mxu0 %v437
        %455 = vmatprep.subr.bf16.mxu0 0
        %456 = vmatpush2.bf16.xpose.msra.mxu0 0
        %457 = vmatprep.subr.bf16.mxu0 0
        %458 = vmatpush2.bf16.xpose.msra.mxu0 0
        %459 = vmatprep.subr.bf16.mxu0 0
        %460 = vmatpush2.bf16.xpose.msra.mxu0 0
        %461 = vmatprep.subr.bf16.mxu0 0
        %462 = vmatpush2.bf16.xpose.msra.mxu0 0
        %463 = vmatprep.subr.bf16.mxu0 0
        %464 = vmatpush2.bf16.xpose.msra.mxu0 0
        %465 = vmatprep.subr.bf16.mxu0 0
        %466 = vmatpush2.bf16.xpose.msra.mxu0 0
        %467 = vmatprep.subr.bf16.mxu0 0
        %468 = vmatpush2.bf16.xpose.msra.mxu0 0
        %469 = vmatprep.subr.bf16.mxu0 0
        %470 = vmatpush2.bf16.xpose.msra.mxu0 0
        %471 = vmatprep.mubr.bf16.mxu0 0
        %472 = vmatmul.mubr.bf16.gmra.mxu0 %v434
        %v473 = vpop.f32.mrf.mxu0
        %v474 = vadd.f32 0.0, %v473
        %v475 = vpop.f32.mrf.mxu0
        %v476 = vpop.f32.mrf.mxu0
        %v477 = vadd.f32 0.0, %v476
        %v478 = vpop.f32.mrf.mxu0
        %479 = vdwg.mxu0
        %vm480 = vcmask 130048
        %v481 = vsel %vm480, %v474, -inf
        %482 = vmax.xlane.f32.xlu0 %v481
        %v483 = vpop.xlane.xlu0 %482
        %vm484 = vcmask 129024
        %v485 = vsel %vm484, %v477, -inf
        %486 = vmax.xlane.f32.xlu0 %v485
        %v487 = vpop.xlane.xlu0 %486
        %v488 = vsub.f32 %v474, %v483
        %v489 = vsub.f32 %v477, %v487
        %v490 = vmul.f32 %v488, 1.442695
        %v491 = vpow.pop %v490
        %v492 = vmul.f32 %v489, 1.442695
        %v493 = vpow.pop %v492
        %v494 = vsel %vm480, %v491, 0.0
        %495 = vadd.xlane.f32.xlu0 %v494
        %v496 = vpop.xlane.xlu0 %495
        %v497 = vsel %vm484, %v493, 0.0
        %498 = vadd.xlane.f32.xlu0 %v497
        %v499 = vpop.xlane.xlu0 %498
        %v500 = vrcp.pop %v496
        %v501 = vrcp.pop %v499
        %v502 = vmul.f32 %v491, %v500
        %v503 = vmul.f32 %v493, %v501
        %v504 = vpack.c.bf16 %v503, %v502
        %v506 = vsel %vm480, %v504, 0
        %508 = vmatprep.subr.bf16.mxu0 0
        %509 = vmatpush1.bf16.msra.mxu0 0
        %510 = vmatprep.subr.bf16.mxu0 0
        %511 = vmatpush1.bf16.msra.mxu0 0
        %512 = vmatprep.subr.bf16.mxu0 0
        %513 = vmatpush1.bf16.msra.mxu0 0
        %514 = vmatprep.subr.bf16.mxu0 0
        %515 = vmatpush1.bf16.msra.mxu0 0
        %516 = vmatprep.subr.bf16.mxu0 0
        %517 = vmatpush1.bf16.msra.mxu0 0
        %518 = vmatprep.subr.bf16.mxu0 0
        %519 = vmatpush1.bf16.msra.mxu0 0
        %520 = vmatprep.subr.bf16.mxu0 0
        %521 = vmatpush1.bf16.msra.mxu0 0
        %522 = vmatprep.subr.bf16.mxu0 0
        %523 = vmatpush1.bf16.msra.mxu0 %v424
        %524 = vmatprep.subr.bf16.mxu0 0
        %525 = vmatpush2.bf16.msra.mxu0 0
        %526 = vmatprep.subr.bf16.mxu0 0
        %527 = vmatpush2.bf16.msra.mxu0 0
        %528 = vmatprep.subr.bf16.mxu0 0
        %529 = vmatpush2.bf16.msra.mxu0 0
        %530 = vmatprep.subr.bf16.mxu0 0
        %531 = vmatpush2.bf16.msra.mxu0 0
        %532 = vmatprep.subr.bf16.mxu0 0
        %533 = vmatpush2.bf16.msra.mxu0 0
        %534 = vmatprep.subr.bf16.mxu0 0
        %535 = vmatpush2.bf16.msra.mxu0 0
        %536 = vmatprep.subr.bf16.mxu0 0
        %537 = vmatpush2.bf16.msra.mxu0 0
        %538 = vmatprep.subr.bf16.mxu0 0
        %539 = vmatpush2.bf16.msra.mxu0 0
        %540 = vmatprep.mubr.bf16.mxu0 0
        %541 = vmatmul.mubr.bf16.gmra.mxu0 %v506
        %v542 = vpop.f32.mrf.mxu0
        %v543 = vadd.f32 0.0, %v542
        %v544 = vpop.f32.mrf.mxu0
        %v545 = vpop.f32.mrf.mxu0
        %v546 = vadd.f32 0.0, %v545
        %v547 = vpop.f32.mrf.mxu0
        %548 = vdwg.mxu0
        %v549 = vpack.c.bf16 %v546, %v543
        %v550 = vld [vmem:[#allocation8] sm:$0xf]
        %v551 = vld [vmem:[#allocation8 + $0x4] sm:$0xf]
        %v552 = vld [vmem:[#allocation8 + $0x8] sm:$0xf]
        %v553 = vld [vmem:[#allocation8 + $0xc] sm:$0xf]
        %v554 = vld [vmem:[#allocation8 + $0x10] sm:$0xf]
        %v555 = vld [vmem:[#allocation8 + $0x14] sm:$0xf]
        %v556 = vld [vmem:[#allocation8 + $0x18] sm:$0xf]
        %v557 = vld [vmem:[#allocation8 + $0x1c] sm:$0xf]
        %v566 = vunpack.c.l.b16 %v550
        %v567 = vunpack.c.l.b16 %v551
        %v568 = vunpack.c.l.b16 %v552
        %v569 = vunpack.c.l.b16 %v553
        %v570 = vunpack.c.l.b16 %v554
        %v571 = vunpack.c.l.b16 %v555
        %v572 = vunpack.c.l.b16 %v556
        %v573 = vunpack.c.l.b16 %v557
        %v574 = vpack.c.b16 %v567, %v566
        %v575 = vpack.c.b16 %v569, %v568
        %v576 = vpack.c.b16 %v571, %v570
        %v577 = vpack.c.b16 %v573, %v572
        %v583 = vsel %vm432, %v549, 0
        %585 = vmatprep.subr.bf16.mxu0 0
        %586 = vmatpush1.bf16.msra.mxu0 0
        %587 = vmatprep.subr.bf16.mxu0 0
        %588 = vmatpush1.bf16.msra.mxu0 0
        %589 = vmatprep.subr.bf16.mxu0 0
        %590 = vmatpush1.bf16.msra.mxu0 0
        %591 = vmatprep.subr.bf16.mxu0 0
        %592 = vmatpush1.bf16.msra.mxu0 0
        %593 = vmatprep.subr.bf16.mxu0 0
        %594 = vmatpush1.bf16.msra.mxu0 %v577
        %595 = vmatprep.subr.bf16.mxu0 0
        %596 = vmatpush1.bf16.msra.mxu0 %v576
        %597 = vmatprep.subr.bf16.mxu0 0
        %598 = vmatpush1.bf16.msra.mxu0 %v575
        %599 = vmatprep.subr.bf16.mxu0 0
        %600 = vmatpush1.bf16.msra.mxu0 %v574
        %601 = vmatprep.subr.bf16.mxu0 0
        %602 = vmatpush2.bf16.msra.mxu0 0
        %603 = vmatprep.subr.bf16.mxu0 0
        %604 = vmatpush2.bf16.msra.mxu0 0
        %605 = vmatprep.subr.bf16.mxu0 0
        %606 = vmatpush2.bf16.msra.mxu0 0
        %607 = vmatprep.subr.bf16.mxu0 0
        %608 = vmatpush2.bf16.msra.mxu0 0
        %609 = vmatprep.subr.bf16.mxu0 0
        %610 = vmatpush2.bf16.msra.mxu0 0
        %611 = vmatprep.subr.bf16.mxu0 0
        %612 = vmatpush2.bf16.msra.mxu0 0
        %613 = vmatprep.subr.bf16.mxu0 0
        %614 = vmatpush2.bf16.msra.mxu0 0
        %615 = vmatprep.subr.bf16.mxu0 0
        %616 = vmatpush2.bf16.msra.mxu0 0
        %617 = vmatprep.mubr.bf16.mxu0 0
        %618 = vmatmul.mubr.bf16.gmra.mxu0 %v583
        %v619 = vpop.f32.mrf.mxu0
        %v620 = vadd.f32 0.0, %v619
        %v621 = vpop.f32.mrf.mxu0
        %v622 = vpop.f32.mrf.mxu0
        %v623 = vpop.f32.mrf.mxu0
        %624 = vdwg.mxu0
        %s625 = scalar_lea.vmem [#allocation8], 32
        %v626 = vld [vmem:[%s625] sm:$0xf]
        %v627 = vld [vmem:[%s625 + $0x4] sm:$0xf]
        %v628 = vld [vmem:[%s625 + $0x8] sm:$0xf]
        %v629 = vld [vmem:[%s625 + $0xc] sm:$0xf]
        %v630 = vld [vmem:[%s625 + $0x10] sm:$0xf]
        %v631 = vld [vmem:[%s625 + $0x14] sm:$0xf]
        %v632 = vld [vmem:[%s625 + $0x18] sm:$0xf]
        %v633 = vld [vmem:[%s625 + $0x1c] sm:$0xf]
        %v634 = vshrl.u32 %v549, 16
        %v644 = vunpack.c.l.b16 %v626
        %v645 = vunpack.c.l.b16 %v627
        %v646 = vunpack.c.l.b16 %v628
        %v647 = vunpack.c.l.b16 %v629
        %v648 = vunpack.c.l.b16 %v630
        %v649 = vunpack.c.l.b16 %v631
        %v650 = vunpack.c.l.b16 %v632
        %v651 = vunpack.c.l.b16 %v633
        %v652 = vpack.c.b16 %v645, %v644
        %v653 = vpack.c.b16 %v647, %v646
        %v654 = vpack.c.b16 %v649, %v648
        %v655 = vpack.c.b16 %v651, %v650
        %v661 = vsel %vm432, %v634, 0
        %663 = vmatprep.subr.bf16.mxu0 0
        %664 = vmatpush1.bf16.msra.mxu0 0
        %665 = vmatprep.subr.bf16.mxu0 0
        %666 = vmatpush1.bf16.msra.mxu0 0
        %667 = vmatprep.subr.bf16.mxu0 0
        %668 = vmatpush1.bf16.msra.mxu0 0
        %669 = vmatprep.subr.bf16.mxu0 0
        %670 = vmatpush1.bf16.msra.mxu0 0
        %671 = vmatprep.subr.bf16.mxu0 0
        %672 = vmatpush1.bf16.msra.mxu0 %v655
        %673 = vmatprep.subr.bf16.mxu0 0
        %674 = vmatpush1.bf16.msra.mxu0 %v654
        %675 = vmatprep.subr.bf16.mxu0 0
        %676 = vmatpush1.bf16.msra.mxu0 %v653
        %677 = vmatprep.subr.bf16.mxu0 0
        %678 = vmatpush1.bf16.msra.mxu0 %v652
        %679 = vmatprep.subr.bf16.mxu0 0
        %680 = vmatpush2.bf16.msra.mxu0 0
        %681 = vmatprep.subr.bf16.mxu0 0
        %682 = vmatpush2.bf16.msra.mxu0 0
        %683 = vmatprep.subr.bf16.mxu0 0
        %684 = vmatpush2.bf16.msra.mxu0 0
        %685 = vmatprep.subr.bf16.mxu0 0
        %686 = vmatpush2.bf16.msra.mxu0 0
        %687 = vmatprep.subr.bf16.mxu0 0
        %688 = vmatpush2.bf16.msra.mxu0 0
        %689 = vmatprep.subr.bf16.mxu0 0
        %690 = vmatpush2.bf16.msra.mxu0 0
        %691 = vmatprep.subr.bf16.mxu0 0
        %692 = vmatpush2.bf16.msra.mxu0 0
        %693 = vmatprep.subr.bf16.mxu0 0
        %694 = vmatpush2.bf16.msra.mxu0 0
        %695 = vmatprep.mubr.bf16.mxu0 0
        %696 = vmatmul.mubr.bf16.gmra.mxu0 %v661
        %v697 = vpop.f32.mrf.mxu0
        %v698 = vadd.f32 0.0, %v697
        %v699 = vpop.f32.mrf.mxu0
        %v700 = vpop.f32.mrf.mxu0
        %v701 = vpop.f32.mrf.mxu0
        %702 = vdwg.mxu0
        %s703 = scalar_lea.vmem [#allocation8], 64
        %v704 = vld [vmem:[%s703] sm:$0xf]
        %v705 = vld [vmem:[%s703 + $0x4] sm:$0xf]
        %v706 = vld [vmem:[%s703 + $0x8] sm:$0xf]
        %v707 = vld [vmem:[%s703 + $0xc] sm:$0xf]
        %v708 = vld [vmem:[%s703 + $0x10] sm:$0xf]
        %v709 = vld [vmem:[%s703 + $0x14] sm:$0xf]
        %v710 = vld [vmem:[%s703 + $0x18] sm:$0xf]
        %v711 = vld [vmem:[%s703 + $0x1c] sm:$0xf]
        %v713 = vrot.slane %v549, 1
        %v722 = vunpack.c.l.b16 %v704
        %v723 = vunpack.c.l.b16 %v705
        %v724 = vunpack.c.l.b16 %v706
        %v725 = vunpack.c.l.b16 %v707
        %v726 = vunpack.c.l.b16 %v708
        %v727 = vunpack.c.l.b16 %v709
        %v728 = vunpack.c.l.b16 %v710
        %v729 = vunpack.c.l.b16 %v711
        %v730 = vpack.c.b16 %v723, %v722
        %v731 = vpack.c.b16 %v725, %v724
        %v732 = vpack.c.b16 %v727, %v726
        %v733 = vpack.c.b16 %v729, %v728
        %v739 = vsel %vm432, %v713, 0
        %741 = vmatprep.subr.bf16.mxu0 0
        %742 = vmatpush1.bf16.msra.mxu0 0
        %743 = vmatprep.subr.bf16.mxu0 0
        %744 = vmatpush1.bf16.msra.mxu0 0
        %745 = vmatprep.subr.bf16.mxu0 0
        %746 = vmatpush1.bf16.msra.mxu0 0
        %747 = vmatprep.subr.bf16.mxu0 0
        %748 = vmatpush1.bf16.msra.mxu0 0
        %749 = vmatprep.subr.bf16.mxu0 0
        %750 = vmatpush1.bf16.msra.mxu0 %v733
        %751 = vmatprep.subr.bf16.mxu0 0
        %752 = vmatpush1.bf16.msra.mxu0 %v732
        %753 = vmatprep.subr.bf16.mxu0 0
        %754 = vmatpush1.bf16.msra.mxu0 %v731
        %755 = vmatprep.subr.bf16.mxu0 0
        %756 = vmatpush1.bf16.msra.mxu0 %v730
        %757 = vmatprep.subr.bf16.mxu0 0
        %758 = vmatpush2.bf16.msra.mxu0 0
        %759 = vmatprep.subr.bf16.mxu0 0
        %760 = vmatpush2.bf16.msra.mxu0 0
        %761 = vmatprep.subr.bf16.mxu0 0
        %762 = vmatpush2.bf16.msra.mxu0 0
        %763 = vmatprep.subr.bf16.mxu0 0
        %764 = vmatpush2.bf16.msra.mxu0 0
        %765 = vmatprep.subr.bf16.mxu0 0
        %766 = vmatpush2.bf16.msra.mxu0 0
        %767 = vmatprep.subr.bf16.mxu0 0
        %768 = vmatpush2.bf16.msra.mxu0 0
        %769 = vmatprep.subr.bf16.mxu0 0
        %770 = vmatpush2.bf16.msra.mxu0 0
        %771 = vmatprep.subr.bf16.mxu0 0
        %772 = vmatpush2.bf16.msra.mxu0 0
        %773 = vmatprep.mubr.bf16.mxu0 0
        %774 = vmatmul.mubr.bf16.gmra.mxu0 %v739
        %v775 = vpop.f32.mrf.mxu0
        %v776 = vadd.f32 0.0, %v775
        %v777 = vpop.f32.mrf.mxu0
        %v778 = vpop.f32.mrf.mxu0
        %v779 = vpop.f32.mrf.mxu0
        %780 = vdwg.mxu0
        %s781 = scalar_lea.vmem [#allocation8], 96
        %v782 = vld [vmem:[%s781] sm:$0xf]
        %v783 = vld [vmem:[%s781 + $0x4] sm:$0xf]
        %v784 = vld [vmem:[%s781 + $0x8] sm:$0xf]
        %v785 = vld [vmem:[%s781 + $0xc] sm:$0xf]
        %v786 = vld [vmem:[%s781 + $0x10] sm:$0xf]
        %v787 = vld [vmem:[%s781 + $0x14] sm:$0xf]
        %v788 = vld [vmem:[%s781 + $0x18] sm:$0xf]
        %v789 = vld [vmem:[%s781 + $0x1c] sm:$0xf]
        %v790 = vrot.slane %v634, 1
        %v799 = vunpack.c.l.b16 %v782
        %v800 = vunpack.c.l.b16 %v783
        %v801 = vunpack.c.l.b16 %v784
        %v802 = vunpack.c.l.b16 %v785
        %v803 = vunpack.c.l.b16 %v786
        %v804 = vunpack.c.l.b16 %v787
        %v805 = vunpack.c.l.b16 %v788
        %v806 = vunpack.c.l.b16 %v789
        %v807 = vpack.c.b16 %v800, %v799
        %v808 = vpack.c.b16 %v802, %v801
        %v809 = vpack.c.b16 %v804, %v803
        %v810 = vpack.c.b16 %v806, %v805
        %v816 = vsel %vm432, %v790, 0
        %818 = vmatprep.subr.bf16.mxu0 0
        %819 = vmatpush1.bf16.msra.mxu0 0
        %820 = vmatprep.subr.bf16.mxu0 0
        %821 = vmatpush1.bf16.msra.mxu0 0
        %822 = vmatprep.subr.bf16.mxu0 0
        %823 = vmatpush1.bf16.msra.mxu0 0
        %824 = vmatprep.subr.bf16.mxu0 0
        %825 = vmatpush1.bf16.msra.mxu0 0
        %826 = vmatprep.subr.bf16.mxu0 0
        %827 = vmatpush1.bf16.msra.mxu0 %v810
        %828 = vmatprep.subr.bf16.mxu0 0
        %829 = vmatpush1.bf16.msra.mxu0 %v809
        %830 = vmatprep.subr.bf16.mxu0 0
        %831 = vmatpush1.bf16.msra.mxu0 %v808
        %832 = vmatprep.subr.bf16.mxu0 0
        %833 = vmatpush1.bf16.msra.mxu0 %v807
        %834 = vmatprep.subr.bf16.mxu0 0
        %835 = vmatpush2.bf16.msra.mxu0 0
        %836 = vmatprep.subr.bf16.mxu0 0
        %837 = vmatpush2.bf16.msra.mxu0 0
        %838 = vmatprep.subr.bf16.mxu0 0
        %839 = vmatpush2.bf16.msra.mxu0 0
        %840 = vmatprep.subr.bf16.mxu0 0
        %841 = vmatpush2.bf16.msra.mxu0 0
        %842 = vmatprep.subr.bf16.mxu0 0
        %843 = vmatpush2.bf16.msra.mxu0 0
        %844 = vmatprep.subr.bf16.mxu0 0
        %845 = vmatpush2.bf16.msra.mxu0 0
        %846 = vmatprep.subr.bf16.mxu0 0
        %847 = vmatpush2.bf16.msra.mxu0 0
        %848 = vmatprep.subr.bf16.mxu0 0
        %849 = vmatpush2.bf16.msra.mxu0 0
        %850 = vmatprep.mubr.bf16.mxu0 0
        %851 = vmatmul.mubr.bf16.gmra.mxu0 %v816
        %v852 = vpop.f32.mrf.mxu0
        %v853 = vadd.f32 0.0, %v852
        %v854 = vpop.f32.mrf.mxu0
        %v855 = vpop.f32.mrf.mxu0
        %v856 = vpop.f32.mrf.mxu0
        %857 = vdwg.mxu0
        %s858 = scalar_lea.vmem [#allocation8], 128
        %v859 = vld [vmem:[%s858] sm:$0xf]
        %v860 = vld [vmem:[%s858 + $0x4] sm:$0xf]
        %v861 = vld [vmem:[%s858 + $0x8] sm:$0xf]
        %v862 = vld [vmem:[%s858 + $0xc] sm:$0xf]
        %v863 = vld [vmem:[%s858 + $0x10] sm:$0xf]
        %v864 = vld [vmem:[%s858 + $0x14] sm:$0xf]
        %v865 = vld [vmem:[%s858 + $0x18] sm:$0xf]
        %v866 = vld [vmem:[%s858 + $0x1c] sm:$0xf]
        %v867 = vrot.slane %v549, 2
        %v876 = vunpack.c.l.b16 %v859
        %v877 = vunpack.c.l.b16 %v860
        %v878 = vunpack.c.l.b16 %v861
        %v879 = vunpack.c.l.b16 %v862
        %v880 = vunpack.c.l.b16 %v863
        %v881 = vunpack.c.l.b16 %v864
        %v882 = vunpack.c.l.b16 %v865
        %v883 = vunpack.c.l.b16 %v866
        %v884 = vpack.c.b16 %v877, %v876
        %v885 = vpack.c.b16 %v879, %v878
        %v886 = vpack.c.b16 %v881, %v880
        %v887 = vpack.c.b16 %v883, %v882
        %v893 = vsel %vm432, %v867, 0
        %895 = vmatprep.subr.bf16.mxu0 0
        %896 = vmatpush1.bf16.msra.mxu0 0
        %897 = vmatprep.subr.bf16.mxu0 0
        %898 = vmatpush1.bf16.msra.mxu0 0
        %899 = vmatprep.subr.bf16.mxu0 0
        %900 = vmatpush1.bf16.msra.mxu0 0
        %901 = vmatprep.subr.bf16.mxu0 0
        %902 = vmatpush1.bf16.msra.mxu0 0
        %903 = vmatprep.subr.bf16.mxu0 0
        %904 = vmatpush1.bf16.msra.mxu0 %v887
        %905 = vmatprep.subr.bf16.mxu0 0
        %906 = vmatpush1.bf16.msra.mxu0 %v886
        %907 = vmatprep.subr.bf16.mxu0 0
        %908 = vmatpush1.bf16.msra.mxu0 %v885
        %909 = vmatprep.subr.bf16.mxu0 0
        %910 = vmatpush1.bf16.msra.mxu0 %v884
        %911 = vmatprep.subr.bf16.mxu0 0
        %912 = vmatpush2.bf16.msra.mxu0 0
        %913 = vmatprep.subr.bf16.mxu0 0
        %914 = vmatpush2.bf16.msra.mxu0 0
        %915 = vmatprep.subr.bf16.mxu0 0
        %916 = vmatpush2.bf16.msra.mxu0 0
        %917 = vmatprep.subr.bf16.mxu0 0
        %918 = vmatpush2.bf16.msra.mxu0 0
        %919 = vmatprep.subr.bf16.mxu0 0
        %920 = vmatpush2.bf16.msra.mxu0 0
        %921 = vmatprep.subr.bf16.mxu0 0
        %922 = vmatpush2.bf16.msra.mxu0 0
        %923 = vmatprep.subr.bf16.mxu0 0
        %924 = vmatpush2.bf16.msra.mxu0 0
        %925 = vmatprep.subr.bf16.mxu0 0
        %926 = vmatpush2.bf16.msra.mxu0 0
        %927 = vmatprep.mubr.bf16.mxu0 0
        %928 = vmatmul.mubr.bf16.gmra.mxu0 %v893
        %v929 = vpop.f32.mrf.mxu0
        %v930 = vadd.f32 0.0, %v929
        %v931 = vpop.f32.mrf.mxu0
        %v932 = vpop.f32.mrf.mxu0
        %v933 = vpop.f32.mrf.mxu0
        %934 = vdwg.mxu0
        %s935 = scalar_lea.vmem [#allocation8], 160
        %v936 = vld [vmem:[%s935] sm:$0xf]
        %v937 = vld [vmem:[%s935 + $0x4] sm:$0xf]
        %v938 = vld [vmem:[%s935 + $0x8] sm:$0xf]
        %v939 = vld [vmem:[%s935 + $0xc] sm:$0xf]
        %v940 = vld [vmem:[%s935 + $0x10] sm:$0xf]
        %v941 = vld [vmem:[%s935 + $0x14] sm:$0xf]
        %v942 = vld [vmem:[%s935 + $0x18] sm:$0xf]
        %v943 = vld [vmem:[%s935 + $0x1c] sm:$0xf]
        %v944 = vrot.slane %v634, 2
        %v953 = vunpack.c.l.b16 %v936
        %v954 = vunpack.c.l.b16 %v937
        %v955 = vunpack.c.l.b16 %v938
        %v956 = vunpack.c.l.b16 %v939
        %v957 = vunpack.c.l.b16 %v940
        %v958 = vunpack.c.l.b16 %v941
        %v959 = vunpack.c.l.b16 %v942
        %v960 = vunpack.c.l.b16 %v943
        %v961 = vpack.c.b16 %v954, %v953
        %v962 = vpack.c.b16 %v956, %v955
        %v963 = vpack.c.b16 %v958, %v957
        %v964 = vpack.c.b16 %v960, %v959
        %v970 = vsel %vm432, %v944, 0
        %972 = vmatprep.subr.bf16.mxu0 0
        %973 = vmatpush1.bf16.msra.mxu0 0
        %974 = vmatprep.subr.bf16.mxu0 0
        %975 = vmatpush1.bf16.msra.mxu0 0
        %976 = vmatprep.subr.bf16.mxu0 0
        %977 = vmatpush1.bf16.msra.mxu0 0
        %978 = vmatprep.subr.bf16.mxu0 0
        %979 = vmatpush1.bf16.msra.mxu0 0
        %980 = vmatprep.subr.bf16.mxu0 0
        %981 = vmatpush1.bf16.msra.mxu0 %v964
        %982 = vmatprep.subr.bf16.mxu0 0
        %983 = vmatpush1.bf16.msra.mxu0 %v963
        %984 = vmatprep.subr.bf16.mxu0 0
        %985 = vmatpush1.bf16.msra.mxu0 %v962
        %986 = vmatprep.subr.bf16.mxu0 0
        %987 = vmatpush1.bf16.msra.mxu0 %v961
        %988 = vmatprep.subr.bf16.mxu0 0
        %989 = vmatpush2.bf16.msra.mxu0 0
        %990 = vmatprep.subr.bf16.mxu0 0
        %991 = vmatpush2.bf16.msra.mxu0 0
        %992 = vmatprep.subr.bf16.mxu0 0
        %993 = vmatpush2.bf16.msra.mxu0 0
        %994 = vmatprep.subr.bf16.mxu0 0
        %995 = vmatpush2.bf16.msra.mxu0 0
        %996 = vmatprep.subr.bf16.mxu0 0
        %997 = vmatpush2.bf16.msra.mxu0 0
        %998 = vmatprep.subr.bf16.mxu0 0
        %999 = vmatpush2.bf16.msra.mxu0 0
        %1000 = vmatprep.subr.bf16.mxu0 0
        %1001 = vmatpush2.bf16.msra.mxu0 0
        %1002 = vmatprep.subr.bf16.mxu0 0
        %1003 = vmatpush2.bf16.msra.mxu0 0
        %1004 = vmatprep.mubr.bf16.mxu0 0
        %1005 = vmatmul.mubr.bf16.gmra.mxu0 %v970
        %v1006 = vpop.f32.mrf.mxu0
        %v1007 = vadd.f32 0.0, %v1006
        %v1008 = vpop.f32.mrf.mxu0
        %v1009 = vpop.f32.mrf.mxu0
        %v1010 = vpop.f32.mrf.mxu0
        %1011 = vdwg.mxu0
        %s1012 = scalar_lea.vmem [#allocation8], 192
        %v1013 = vld [vmem:[%s1012] sm:$0xf]
        %v1014 = vld [vmem:[%s1012 + $0x4] sm:$0xf]
        %v1015 = vld [vmem:[%s1012 + $0x8] sm:$0xf]
        %v1016 = vld [vmem:[%s1012 + $0xc] sm:$0xf]
        %v1017 = vld [vmem:[%s1012 + $0x10] sm:$0xf]
        %v1018 = vld [vmem:[%s1012 + $0x14] sm:$0xf]
        %v1019 = vld [vmem:[%s1012 + $0x18] sm:$0xf]
        %v1020 = vld [vmem:[%s1012 + $0x1c] sm:$0xf]
        %v1021 = vrot.slane %v549, 3
        %v1030 = vunpack.c.l.b16 %v1013
        %v1031 = vunpack.c.l.b16 %v1014
        %v1032 = vunpack.c.l.b16 %v1015
        %v1033 = vunpack.c.l.b16 %v1016
        %v1034 = vunpack.c.l.b16 %v1017
        %v1035 = vunpack.c.l.b16 %v1018
        %v1036 = vunpack.c.l.b16 %v1019
        %v1037 = vunpack.c.l.b16 %v1020
        %v1038 = vpack.c.b16 %v1031, %v1030
        %v1039 = vpack.c.b16 %v1033, %v1032
        %v1040 = vpack.c.b16 %v1035, %v1034
        %v1041 = vpack.c.b16 %v1037, %v1036
        %v1047 = vsel %vm432, %v1021, 0
        %1049 = vmatprep.subr.bf16.mxu0 0
        %1050 = vmatpush1.bf16.msra.mxu0 0
        %1051 = vmatprep.subr.bf16.mxu0 0
        %1052 = vmatpush1.bf16.msra.mxu0 0
        %1053 = vmatprep.subr.bf16.mxu0 0
        %1054 = vmatpush1.bf16.msra.mxu0 0
        %1055 = vmatprep.subr.bf16.mxu0 0
        %1056 = vmatpush1.bf16.msra.mxu0 0
        %1057 = vmatprep.subr.bf16.mxu0 0
        %1058 = vmatpush1.bf16.msra.mxu0 %v1041
        %1059 = vmatprep.subr.bf16.mxu0 0
        %1060 = vmatpush1.bf16.msra.mxu0 %v1040
        %1061 = vmatprep.subr.bf16.mxu0 0
        %1062 = vmatpush1.bf16.msra.mxu0 %v1039
        %1063 = vmatprep.subr.bf16.mxu0 0
        %1064 = vmatpush1.bf16.msra.mxu0 %v1038
        %1065 = vmatprep.subr.bf16.mxu0 0
        %1066 = vmatpush2.bf16.msra.mxu0 0
        %1067 = vmatprep.subr.bf16.mxu0 0
        %1068 = vmatpush2.bf16.msra.mxu0 0
        %1069 = vmatprep.subr.bf16.mxu0 0
        %1070 = vmatpush2.bf16.msra.mxu0 0
        %1071 = vmatprep.subr.bf16.mxu0 0
        %1072 = vmatpush2.bf16.msra.mxu0 0
        %1073 = vmatprep.subr.bf16.mxu0 0
        %1074 = vmatpush2.bf16.msra.mxu0 0
        %1075 = vmatprep.subr.bf16.mxu0 0
        %1076 = vmatpush2.bf16.msra.mxu0 0
        %1077 = vmatprep.subr.bf16.mxu0 0
        %1078 = vmatpush2.bf16.msra.mxu0 0
        %1079 = vmatprep.subr.bf16.mxu0 0
        %1080 = vmatpush2.bf16.msra.mxu0 0
        %1081 = vmatprep.mubr.bf16.mxu0 0
        %1082 = vmatmul.mubr.bf16.gmra.mxu0 %v1047
        %v1083 = vpop.f32.mrf.mxu0
        %v1084 = vadd.f32 0.0, %v1083
        %v1085 = vpop.f32.mrf.mxu0
        %v1086 = vpop.f32.mrf.mxu0
        %v1087 = vpop.f32.mrf.mxu0
        %1088 = vdwg.mxu0
        %s1089 = scalar_lea.vmem [#allocation8], 224
        %v1090 = vld [vmem:[%s1089] sm:$0xf]
        %v1091 = vld [vmem:[%s1089 + $0x4] sm:$0xf]
        %v1092 = vld [vmem:[%s1089 + $0x8] sm:$0xf]
        %v1093 = vld [vmem:[%s1089 + $0xc] sm:$0xf]
        %v1094 = vld [vmem:[%s1089 + $0x10] sm:$0xf]
        %v1095 = vld [vmem:[%s1089 + $0x14] sm:$0xf]
        %v1096 = vld [vmem:[%s1089 + $0x18] sm:$0xf]
        %v1097 = vld [vmem:[%s1089 + $0x1c] sm:$0xf]
        %v1098 = vrot.slane %v634, 3
        %v1107 = vunpack.c.l.b16 %v1090
        %v1108 = vunpack.c.l.b16 %v1091
        %v1109 = vunpack.c.l.b16 %v1092
        %v1110 = vunpack.c.l.b16 %v1093
        %v1111 = vunpack.c.l.b16 %v1094
        %v1112 = vunpack.c.l.b16 %v1095
        %v1113 = vunpack.c.l.b16 %v1096
        %v1114 = vunpack.c.l.b16 %v1097
        %v1115 = vpack.c.b16 %v1108, %v1107
        %v1116 = vpack.c.b16 %v1110, %v1109
        %v1117 = vpack.c.b16 %v1112, %v1111
        %v1118 = vpack.c.b16 %v1114, %v1113
        %v1124 = vsel %vm432, %v1098, 0
        %1126 = vmatprep.subr.bf16.mxu0 0
        %1127 = vmatpush1.bf16.msra.mxu0 0
        %1128 = vmatprep.subr.bf16.mxu0 0
        %1129 = vmatpush1.bf16.msra.mxu0 0
        %1130 = vmatprep.subr.bf16.mxu0 0
        %1131 = vmatpush1.bf16.msra.mxu0 0
        %1132 = vmatprep.subr.bf16.mxu0 0
        %1133 = vmatpush1.bf16.msra.mxu0 0
        %1134 = vmatprep.subr.bf16.mxu0 0
        %1135 = vmatpush1.bf16.msra.mxu0 %v1118
        %1136 = vmatprep.subr.bf16.mxu0 0
        %1137 = vmatpush1.bf16.msra.mxu0 %v1117
        %1138 = vmatprep.subr.bf16.mxu0 0
        %1139 = vmatpush1.bf16.msra.mxu0 %v1116
        %1140 = vmatprep.subr.bf16.mxu0 0
        %1141 = vmatpush1.bf16.msra.mxu0 %v1115
        %1142 = vmatprep.subr.bf16.mxu0 0
        %1143 = vmatpush2.bf16.msra.mxu0 0
        %1144 = vmatprep.subr.bf16.mxu0 0
        %1145 = vmatpush2.bf16.msra.mxu0 0
        %1146 = vmatprep.subr.bf16.mxu0 0
        %1147 = vmatpush2.bf16.msra.mxu0 0
        %1148 = vmatprep.subr.bf16.mxu0 0
        %1149 = vmatpush2.bf16.msra.mxu0 0
        %1150 = vmatprep.subr.bf16.mxu0 0
        %1151 = vmatpush2.bf16.msra.mxu0 0
        %1152 = vmatprep.subr.bf16.mxu0 0
        %1153 = vmatpush2.bf16.msra.mxu0 0
        %1154 = vmatprep.subr.bf16.mxu0 0
        %1155 = vmatpush2.bf16.msra.mxu0 0
        %1156 = vmatprep.subr.bf16.mxu0 0
        %1157 = vmatpush2.bf16.msra.mxu0 0
        %1158 = vmatprep.mubr.bf16.mxu0 0
        %1159 = vmatmul.mubr.bf16.gmra.mxu0 %v1124
        %v1160 = vpop.f32.mrf.mxu0
        %v1161 = vadd.f32 0.0, %v1160
        %v1162 = vpop.f32.mrf.mxu0
        %v1163 = vpop.f32.mrf.mxu0
        %v1164 = vpop.f32.mrf.mxu0
        %1165 = vdwg.mxu0
        %s1166 = scalar_lea.vmem [#allocation8], 256
        %v1167 = vld [vmem:[%s1166] sm:$0xf]
        %v1168 = vld [vmem:[%s1166 + $0x4] sm:$0xf]
        %v1169 = vld [vmem:[%s1166 + $0x8] sm:$0xf]
        %v1170 = vld [vmem:[%s1166 + $0xc] sm:$0xf]
        %v1171 = vld [vmem:[%s1166 + $0x10] sm:$0xf]
        %v1172 = vld [vmem:[%s1166 + $0x14] sm:$0xf]
        %v1173 = vld [vmem:[%s1166 + $0x18] sm:$0xf]
        %v1174 = vld [vmem:[%s1166 + $0x1c] sm:$0xf]
        %v1175 = vrot.slane %v549, 4
        %v1184 = vunpack.c.l.b16 %v1167
        %v1185 = vunpack.c.l.b16 %v1168
        %v1186 = vunpack.c.l.b16 %v1169
        %v1187 = vunpack.c.l.b16 %v1170
        %v1188 = vunpack.c.l.b16 %v1171
        %v1189 = vunpack.c.l.b16 %v1172
        %v1190 = vunpack.c.l.b16 %v1173
        %v1191 = vunpack.c.l.b16 %v1174
        %v1192 = vpack.c.b16 %v1185, %v1184
        %v1193 = vpack.c.b16 %v1187, %v1186
        %v1194 = vpack.c.b16 %v1189, %v1188
        %v1195 = vpack.c.b16 %v1191, %v1190
        %v1201 = vsel %vm432, %v1175, 0
        %1203 = vmatprep.subr.bf16.mxu0 0
        %1204 = vmatpush1.bf16.msra.mxu0 0
        %1205 = vmatprep.subr.bf16.mxu0 0
        %1206 = vmatpush1.bf16.msra.mxu0 0
        %1207 = vmatprep.subr.bf16.mxu0 0
        %1208 = vmatpush1.bf16.msra.mxu0 0
        %1209 = vmatprep.subr.bf16.mxu0 0
        %1210 = vmatpush1.bf16.msra.mxu0 0
        %1211 = vmatprep.subr.bf16.mxu0 0
        %1212 = vmatpush1.bf16.msra.mxu0 %v1195
        %1213 = vmatprep.subr.bf16.mxu0 0
        %1214 = vmatpush1.bf16.msra.mxu0 %v1194
        %1215 = vmatprep.subr.bf16.mxu0 0
        %1216 = vmatpush1.bf16.msra.mxu0 %v1193
        %1217 = vmatprep.subr.bf16.mxu0 0
        %1218 = vmatpush1.bf16.msra.mxu0 %v1192
        %1219 = vmatprep.subr.bf16.mxu0 0
        %1220 = vmatpush2.bf16.msra.mxu0 0
        %1221 = vmatprep.subr.bf16.mxu0 0
        %1222 = vmatpush2.bf16.msra.mxu0 0
        %1223 = vmatprep.subr.bf16.mxu0 0
        %1224 = vmatpush2.bf16.msra.mxu0 0
        %1225 = vmatprep.subr.bf16.mxu0 0
        %1226 = vmatpush2.bf16.msra.mxu0 0
        %1227 = vmatprep.subr.bf16.mxu0 0
        %1228 = vmatpush2.bf16.msra.mxu0 0
        %1229 = vmatprep.subr.bf16.mxu0 0
        %1230 = vmatpush2.bf16.msra.mxu0 0
        %1231 = vmatprep.subr.bf16.mxu0 0
        %1232 = vmatpush2.bf16.msra.mxu0 0
        %1233 = vmatprep.subr.bf16.mxu0 0
        %1234 = vmatpush2.bf16.msra.mxu0 0
        %1235 = vmatprep.mubr.bf16.mxu0 0
        %1236 = vmatmul.mubr.bf16.gmra.mxu0 %v1201
        %v1237 = vpop.f32.mrf.mxu0
        %v1238 = vadd.f32 0.0, %v1237
        %v1239 = vpop.f32.mrf.mxu0
        %v1240 = vpop.f32.mrf.mxu0
        %v1241 = vpop.f32.mrf.mxu0
        %1242 = vdwg.mxu0
        %s1243 = scalar_lea.vmem [#allocation8], 288
        %v1244 = vld [vmem:[%s1243] sm:$0xf]
        %v1245 = vld [vmem:[%s1243 + $0x4] sm:$0xf]
        %v1246 = vld [vmem:[%s1243 + $0x8] sm:$0xf]
        %v1247 = vld [vmem:[%s1243 + $0xc] sm:$0xf]
        %v1248 = vld [vmem:[%s1243 + $0x10] sm:$0xf]
        %v1249 = vld [vmem:[%s1243 + $0x14] sm:$0xf]
        %v1250 = vld [vmem:[%s1243 + $0x18] sm:$0xf]
        %v1251 = vld [vmem:[%s1243 + $0x1c] sm:$0xf]
        %v1252 = vrot.slane %v634, 4
        %v1261 = vunpack.c.l.b16 %v1244
        %v1262 = vunpack.c.l.b16 %v1245
        %v1263 = vunpack.c.l.b16 %v1246
        %v1264 = vunpack.c.l.b16 %v1247
        %v1265 = vunpack.c.l.b16 %v1248
        %v1266 = vunpack.c.l.b16 %v1249
        %v1267 = vunpack.c.l.b16 %v1250
        %v1268 = vunpack.c.l.b16 %v1251
        %v1269 = vpack.c.b16 %v1262, %v1261
        %v1270 = vpack.c.b16 %v1264, %v1263
        %v1271 = vpack.c.b16 %v1266, %v1265
        %v1272 = vpack.c.b16 %v1268, %v1267
        %v1278 = vsel %vm432, %v1252, 0
        %1280 = vmatprep.subr.bf16.mxu0 0
        %1281 = vmatpush1.bf16.msra.mxu0 0
        %1282 = vmatprep.subr.bf16.mxu0 0
        %1283 = vmatpush1.bf16.msra.mxu0 0
        %1284 = vmatprep.subr.bf16.mxu0 0
        %1285 = vmatpush1.bf16.msra.mxu0 0
        %1286 = vmatprep.subr.bf16.mxu0 0
        %1287 = vmatpush1.bf16.msra.mxu0 0
        %1288 = vmatprep.subr.bf16.mxu0 0
        %1289 = vmatpush1.bf16.msra.mxu0 %v1272
        %1290 = vmatprep.subr.bf16.mxu0 0
        %1291 = vmatpush1.bf16.msra.mxu0 %v1271
        %1292 = vmatprep.subr.bf16.mxu0 0
        %1293 = vmatpush1.bf16.msra.mxu0 %v1270
        %1294 = vmatprep.subr.bf16.mxu0 0
        %1295 = vmatpush1.bf16.msra.mxu0 %v1269
        %1296 = vmatprep.subr.bf16.mxu0 0
        %1297 = vmatpush2.bf16.msra.mxu0 0
        %1298 = vmatprep.subr.bf16.mxu0 0
        %1299 = vmatpush2.bf16.msra.mxu0 0
        %1300 = vmatprep.subr.bf16.mxu0 0
        %1301 = vmatpush2.bf16.msra.mxu0 0
        %1302 = vmatprep.subr.bf16.mxu0 0
        %1303 = vmatpush2.bf16.msra.mxu0 0
        %1304 = vmatprep.subr.bf16.mxu0 0
        %1305 = vmatpush2.bf16.msra.mxu0 0
        %1306 = vmatprep.subr.bf16.mxu0 0
        %1307 = vmatpush2.bf16.msra.mxu0 0
        %1308 = vmatprep.subr.bf16.mxu0 0
        %1309 = vmatpush2.bf16.msra.mxu0 0
        %1310 = vmatprep.subr.bf16.mxu0 0
        %1311 = vmatpush2.bf16.msra.mxu0 0
        %1312 = vmatprep.mubr.bf16.mxu0 0
        %1313 = vmatmul.mubr.bf16.gmra.mxu0 %v1278
        %v1314 = vpop.f32.mrf.mxu0
        %v1315 = vadd.f32 0.0, %v1314
        %v1316 = vpop.f32.mrf.mxu0
        %v1317 = vpop.f32.mrf.mxu0
        %v1318 = vpop.f32.mrf.mxu0
        %1319 = vdwg.mxu0
        %s1320 = scalar_lea.vmem [#allocation8], 320
        %v1321 = vld [vmem:[%s1320] sm:$0xf]
        %v1322 = vld [vmem:[%s1320 + $0x4] sm:$0xf]
        %v1323 = vld [vmem:[%s1320 + $0x8] sm:$0xf]
        %v1324 = vld [vmem:[%s1320 + $0xc] sm:$0xf]
        %v1325 = vld [vmem:[%s1320 + $0x10] sm:$0xf]
        %v1326 = vld [vmem:[%s1320 + $0x14] sm:$0xf]
        %v1327 = vld [vmem:[%s1320 + $0x18] sm:$0xf]
        %v1328 = vld [vmem:[%s1320 + $0x1c] sm:$0xf]
        %v1329 = vrot.slane %v549, 5
        %v1338 = vunpack.c.l.b16 %v1321
        %v1339 = vunpack.c.l.b16 %v1322
        %v1340 = vunpack.c.l.b16 %v1323
        %v1341 = vunpack.c.l.b16 %v1324
        %v1342 = vunpack.c.l.b16 %v1325
        %v1343 = vunpack.c.l.b16 %v1326
        %v1344 = vunpack.c.l.b16 %v1327
        %v1345 = vunpack.c.l.b16 %v1328
        %v1346 = vpack.c.b16 %v1339, %v1338
        %v1347 = vpack.c.b16 %v1341, %v1340
        %v1348 = vpack.c.b16 %v1343, %v1342
        %v1349 = vpack.c.b16 %v1345, %v1344
        %v1355 = vsel %vm432, %v1329, 0
        %1357 = vmatprep.subr.bf16.mxu0 0
        %1358 = vmatpush1.bf16.msra.mxu0 0
        %1359 = vmatprep.subr.bf16.mxu0 0
        %1360 = vmatpush1.bf16.msra.mxu0 0
        %1361 = vmatprep.subr.bf16.mxu0 0
        %1362 = vmatpush1.bf16.msra.mxu0 0
        %1363 = vmatprep.subr.bf16.mxu0 0
        %1364 = vmatpush1.bf16.msra.mxu0 0
        %1365 = vmatprep.subr.bf16.mxu0 0
        %1366 = vmatpush1.bf16.msra.mxu0 %v1349
        %1367 = vmatprep.subr.bf16.mxu0 0
        %1368 = vmatpush1.bf16.msra.mxu0 %v1348
        %1369 = vmatprep.subr.bf16.mxu0 0
        %1370 = vmatpush1.bf16.msra.mxu0 %v1347
        %1371 = vmatprep.subr.bf16.mxu0 0
        %1372 = vmatpush1.bf16.msra.mxu0 %v1346
        %1373 = vmatprep.subr.bf16.mxu0 0
        %1374 = vmatpush2.bf16.msra.mxu0 0
        %1375 = vmatprep.subr.bf16.mxu0 0
        %1376 = vmatpush2.bf16.msra.mxu0 0
        %1377 = vmatprep.subr.bf16.mxu0 0
        %1378 = vmatpush2.bf16.msra.mxu0 0
        %1379 = vmatprep.subr.bf16.mxu0 0
        %1380 = vmatpush2.bf16.msra.mxu0 0
        %1381 = vmatprep.subr.bf16.mxu0 0
        %1382 = vmatpush2.bf16.msra.mxu0 0
        %1383 = vmatprep.subr.bf16.mxu0 0
        %1384 = vmatpush2.bf16.msra.mxu0 0
        %1385 = vmatprep.subr.bf16.mxu0 0
        %1386 = vmatpush2.bf16.msra.mxu0 0
        %1387 = vmatprep.subr.bf16.mxu0 0
        %1388 = vmatpush2.bf16.msra.mxu0 0
        %1389 = vmatprep.mubr.bf16.mxu0 0
        %1390 = vmatmul.mubr.bf16.gmra.mxu0 %v1355
        %v1391 = vpop.f32.mrf.mxu0
        %v1392 = vadd.f32 0.0, %v1391
        %v1393 = vpop.f32.mrf.mxu0
        %v1394 = vpop.f32.mrf.mxu0
        %v1395 = vpop.f32.mrf.mxu0
        %1396 = vdwg.mxu0
        %s1397 = scalar_lea.vmem [#allocation8], 352
        %v1398 = vld [vmem:[%s1397] sm:$0xf]
        %v1399 = vld [vmem:[%s1397 + $0x4] sm:$0xf]
        %v1400 = vld [vmem:[%s1397 + $0x8] sm:$0xf]
        %v1401 = vld [vmem:[%s1397 + $0xc] sm:$0xf]
        %v1402 = vld [vmem:[%s1397 + $0x10] sm:$0xf]
        %v1403 = vld [vmem:[%s1397 + $0x14] sm:$0xf]
        %v1404 = vld [vmem:[%s1397 + $0x18] sm:$0xf]
        %v1405 = vld [vmem:[%s1397 + $0x1c] sm:$0xf]
        %v1406 = vrot.slane %v634, 5
        %v1415 = vunpack.c.l.b16 %v1398
        %v1416 = vunpack.c.l.b16 %v1399
        %v1417 = vunpack.c.l.b16 %v1400
        %v1418 = vunpack.c.l.b16 %v1401
        %v1419 = vunpack.c.l.b16 %v1402
        %v1420 = vunpack.c.l.b16 %v1403
        %v1421 = vunpack.c.l.b16 %v1404
        %v1422 = vunpack.c.l.b16 %v1405
        %v1423 = vpack.c.b16 %v1416, %v1415
        %v1424 = vpack.c.b16 %v1418, %v1417
        %v1425 = vpack.c.b16 %v1420, %v1419
        %v1426 = vpack.c.b16 %v1422, %v1421
        %v1432 = vsel %vm432, %v1406, 0
        %1434 = vmatprep.subr.bf16.mxu0 0
        %1435 = vmatpush1.bf16.msra.mxu0 0
        %1436 = vmatprep.subr.bf16.mxu0 0
        %1437 = vmatpush1.bf16.msra.mxu0 0
        %1438 = vmatprep.subr.bf16.mxu0 0
        %1439 = vmatpush1.bf16.msra.mxu0 0
        %1440 = vmatprep.subr.bf16.mxu0 0
        %1441 = vmatpush1.bf16.msra.mxu0 0
        %1442 = vmatprep.subr.bf16.mxu0 0
        %1443 = vmatpush1.bf16.msra.mxu0 %v1426
        %1444 = vmatprep.subr.bf16.mxu0 0
        %1445 = vmatpush1.bf16.msra.mxu0 %v1425
        %1446 = vmatprep.subr.bf16.mxu0 0
        %1447 = vmatpush1.bf16.msra.mxu0 %v1424
        %1448 = vmatprep.subr.bf16.mxu0 0
        %1449 = vmatpush1.bf16.msra.mxu0 %v1423
        %1450 = vmatprep.subr.bf16.mxu0 0
        %1451 = vmatpush2.bf16.msra.mxu0 0
        %1452 = vmatprep.subr.bf16.mxu0 0
        %1453 = vmatpush2.bf16.msra.mxu0 0
        %1454 = vmatprep.subr.bf16.mxu0 0
        %1455 = vmatpush2.bf16.msra.mxu0 0
        %1456 = vmatprep.subr.bf16.mxu0 0
        %1457 = vmatpush2.bf16.msra.mxu0 0
        %1458 = vmatprep.subr.bf16.mxu0 0
        %1459 = vmatpush2.bf16.msra.mxu0 0
        %1460 = vmatprep.subr.bf16.mxu0 0
        %1461 = vmatpush2.bf16.msra.mxu0 0
        %1462 = vmatprep.subr.bf16.mxu0 0
        %1463 = vmatpush2.bf16.msra.mxu0 0
        %1464 = vmatprep.subr.bf16.mxu0 0
        %1465 = vmatpush2.bf16.msra.mxu0 0
        %1466 = vmatprep.mubr.bf16.mxu0 0
        %1467 = vmatmul.mubr.bf16.gmra.mxu0 %v1432
        %v1468 = vpop.f32.mrf.mxu0
        %v1469 = vadd.f32 0.0, %v1468
        %v1470 = vpop.f32.mrf.mxu0
        %v1471 = vpop.f32.mrf.mxu0
        %v1472 = vpop.f32.mrf.mxu0
        %1473 = vdwg.mxu0
        %s1474 = scalar_lea.vmem [#allocation8], 384
        %v1475 = vld [vmem:[%s1474] sm:$0xf]
        %v1476 = vld [vmem:[%s1474 + $0x4] sm:$0xf]
        %v1477 = vld [vmem:[%s1474 + $0x8] sm:$0xf]
        %v1478 = vld [vmem:[%s1474 + $0xc] sm:$0xf]
        %v1479 = vld [vmem:[%s1474 + $0x10] sm:$0xf]
        %v1480 = vld [vmem:[%s1474 + $0x14] sm:$0xf]
        %v1481 = vld [vmem:[%s1474 + $0x18] sm:$0xf]
        %v1482 = vld [vmem:[%s1474 + $0x1c] sm:$0xf]
        %v1483 = vrot.slane %v549, 6
        %v1492 = vunpack.c.l.b16 %v1475
        %v1493 = vunpack.c.l.b16 %v1476
        %v1494 = vunpack.c.l.b16 %v1477
        %v1495 = vunpack.c.l.b16 %v1478
        %v1496 = vunpack.c.l.b16 %v1479
        %v1497 = vunpack.c.l.b16 %v1480
        %v1498 = vunpack.c.l.b16 %v1481
        %v1499 = vunpack.c.l.b16 %v1482
        %v1500 = vpack.c.b16 %v1493, %v1492
        %v1501 = vpack.c.b16 %v1495, %v1494
        %v1502 = vpack.c.b16 %v1497, %v1496
        %v1503 = vpack.c.b16 %v1499, %v1498
        %v1509 = vsel %vm432, %v1483, 0
        %1511 = vmatprep.subr.bf16.mxu0 0
        %1512 = vmatpush1.bf16.msra.mxu0 0
        %1513 = vmatprep.subr.bf16.mxu0 0
        %1514 = vmatpush1.bf16.msra.mxu0 0
        %1515 = vmatprep.subr.bf16.mxu0 0
        %1516 = vmatpush1.bf16.msra.mxu0 0
        %1517 = vmatprep.subr.bf16.mxu0 0
        %1518 = vmatpush1.bf16.msra.mxu0 0
        %1519 = vmatprep.subr.bf16.mxu0 0
        %1520 = vmatpush1.bf16.msra.mxu0 %v1503
        %1521 = vmatprep.subr.bf16.mxu0 0
        %1522 = vmatpush1.bf16.msra.mxu0 %v1502
        %1523 = vmatprep.subr.bf16.mxu0 0
        %1524 = vmatpush1.bf16.msra.mxu0 %v1501
        %1525 = vmatprep.subr.bf16.mxu0 0
        %1526 = vmatpush1.bf16.msra.mxu0 %v1500
        %1527 = vmatprep.subr.bf16.mxu0 0
        %1528 = vmatpush2.bf16.msra.mxu0 0
        %1529 = vmatprep.subr.bf16.mxu0 0
        %1530 = vmatpush2.bf16.msra.mxu0 0
        %1531 = vmatprep.subr.bf16.mxu0 0
        %1532 = vmatpush2.bf16.msra.mxu0 0
        %1533 = vmatprep.subr.bf16.mxu0 0
        %1534 = vmatpush2.bf16.msra.mxu0 0
        %1535 = vmatprep.subr.bf16.mxu0 0
        %1536 = vmatpush2.bf16.msra.mxu0 0
        %1537 = vmatprep.subr.bf16.mxu0 0
        %1538 = vmatpush2.bf16.msra.mxu0 0
        %1539 = vmatprep.subr.bf16.mxu0 0
        %1540 = vmatpush2.bf16.msra.mxu0 0
        %1541 = vmatprep.subr.bf16.mxu0 0
        %1542 = vmatpush2.bf16.msra.mxu0 0
        %1543 = vmatprep.mubr.bf16.mxu0 0
        %1544 = vmatmul.mubr.bf16.gmra.mxu0 %v1509
        %v1545 = vpop.f32.mrf.mxu0
        %v1546 = vadd.f32 0.0, %v1545
        %v1547 = vpop.f32.mrf.mxu0
        %v1548 = vpop.f32.mrf.mxu0
        %v1549 = vpop.f32.mrf.mxu0
        %1550 = vdwg.mxu0
        %s1551 = scalar_lea.vmem [#allocation8], 416
        %v1552 = vld [vmem:[%s1551] sm:$0xf]
        %v1553 = vld [vmem:[%s1551 + $0x4] sm:$0xf]
        %v1554 = vld [vmem:[%s1551 + $0x8] sm:$0xf]
        %v1555 = vld [vmem:[%s1551 + $0xc] sm:$0xf]
        %v1556 = vld [vmem:[%s1551 + $0x10] sm:$0xf]
        %v1557 = vld [vmem:[%s1551 + $0x14] sm:$0xf]
        %v1558 = vld [vmem:[%s1551 + $0x18] sm:$0xf]
        %v1559 = vld [vmem:[%s1551 + $0x1c] sm:$0xf]
        %v1560 = vrot.slane %v634, 6
        %v1569 = vunpack.c.l.b16 %v1552
        %v1570 = vunpack.c.l.b16 %v1553
        %v1571 = vunpack.c.l.b16 %v1554
        %v1572 = vunpack.c.l.b16 %v1555
        %v1573 = vunpack.c.l.b16 %v1556
        %v1574 = vunpack.c.l.b16 %v1557
        %v1575 = vunpack.c.l.b16 %v1558
        %v1576 = vunpack.c.l.b16 %v1559
        %v1577 = vpack.c.b16 %v1570, %v1569
        %v1578 = vpack.c.b16 %v1572, %v1571
        %v1579 = vpack.c.b16 %v1574, %v1573
        %v1580 = vpack.c.b16 %v1576, %v1575
        %v1586 = vsel %vm432, %v1560, 0
        %1588 = vmatprep.subr.bf16.mxu0 0
        %1589 = vmatpush1.bf16.msra.mxu0 0
        %1590 = vmatprep.subr.bf16.mxu0 0
        %1591 = vmatpush1.bf16.msra.mxu0 0
        %1592 = vmatprep.subr.bf16.mxu0 0
        %1593 = vmatpush1.bf16.msra.mxu0 0
        %1594 = vmatprep.subr.bf16.mxu0 0
        %1595 = vmatpush1.bf16.msra.mxu0 0
        %1596 = vmatprep.subr.bf16.mxu0 0
        %1597 = vmatpush1.bf16.msra.mxu0 %v1580
        %1598 = vmatprep.subr.bf16.mxu0 0
        %1599 = vmatpush1.bf16.msra.mxu0 %v1579
        %1600 = vmatprep.subr.bf16.mxu0 0
        %1601 = vmatpush1.bf16.msra.mxu0 %v1578
        %1602 = vmatprep.subr.bf16.mxu0 0
        %1603 = vmatpush1.bf16.msra.mxu0 %v1577
        %1604 = vmatprep.subr.bf16.mxu0 0
        %1605 = vmatpush2.bf16.msra.mxu0 0
        %1606 = vmatprep.subr.bf16.mxu0 0
        %1607 = vmatpush2.bf16.msra.mxu0 0
        %1608 = vmatprep.subr.bf16.mxu0 0
        %1609 = vmatpush2.bf16.msra.mxu0 0
        %1610 = vmatprep.subr.bf16.mxu0 0
        %1611 = vmatpush2.bf16.msra.mxu0 0
        %1612 = vmatprep.subr.bf16.mxu0 0
        %1613 = vmatpush2.bf16.msra.mxu0 0
        %1614 = vmatprep.subr.bf16.mxu0 0
        %1615 = vmatpush2.bf16.msra.mxu0 0
        %1616 = vmatprep.subr.bf16.mxu0 0
        %1617 = vmatpush2.bf16.msra.mxu0 0
        %1618 = vmatprep.subr.bf16.mxu0 0
        %1619 = vmatpush2.bf16.msra.mxu0 0
        %1620 = vmatprep.mubr.bf16.mxu0 0
        %1621 = vmatmul.mubr.bf16.gmra.mxu0 %v1586
        %v1622 = vpop.f32.mrf.mxu0
        %v1623 = vadd.f32 0.0, %v1622
        %v1624 = vpop.f32.mrf.mxu0
        %v1625 = vpop.f32.mrf.mxu0
        %v1626 = vpop.f32.mrf.mxu0
        %1627 = vdwg.mxu0
        %s1628 = scalar_lea.vmem [#allocation8], 448
        %v1629 = vld [vmem:[%s1628] sm:$0xf]
        %v1630 = vld [vmem:[%s1628 + $0x4] sm:$0xf]
        %v1631 = vld [vmem:[%s1628 + $0x8] sm:$0xf]
        %v1632 = vld [vmem:[%s1628 + $0xc] sm:$0xf]
        %v1633 = vld [vmem:[%s1628 + $0x10] sm:$0xf]
        %v1634 = vld [vmem:[%s1628 + $0x14] sm:$0xf]
        %v1635 = vld [vmem:[%s1628 + $0x18] sm:$0xf]
        %v1636 = vld [vmem:[%s1628 + $0x1c] sm:$0xf]
        %v1637 = vrot.slane %v549, 7
        %v1646 = vunpack.c.l.b16 %v1629
        %v1647 = vunpack.c.l.b16 %v1630
        %v1648 = vunpack.c.l.b16 %v1631
        %v1649 = vunpack.c.l.b16 %v1632
        %v1650 = vunpack.c.l.b16 %v1633
        %v1651 = vunpack.c.l.b16 %v1634
        %v1652 = vunpack.c.l.b16 %v1635
        %v1653 = vunpack.c.l.b16 %v1636
        %v1654 = vpack.c.b16 %v1647, %v1646
        %v1655 = vpack.c.b16 %v1649, %v1648
        %v1656 = vpack.c.b16 %v1651, %v1650
        %v1657 = vpack.c.b16 %v1653, %v1652
        %v1663 = vsel %vm432, %v1637, 0
        %1665 = vmatprep.subr.bf16.mxu0 0
        %1666 = vmatpush1.bf16.msra.mxu0 0
        %1667 = vmatprep.subr.bf16.mxu0 0
        %1668 = vmatpush1.bf16.msra.mxu0 0
        %1669 = vmatprep.subr.bf16.mxu0 0
        %1670 = vmatpush1.bf16.msra.mxu0 0
        %1671 = vmatprep.subr.bf16.mxu0 0
        %1672 = vmatpush1.bf16.msra.mxu0 0
        %1673 = vmatprep.subr.bf16.mxu0 0
        %1674 = vmatpush1.bf16.msra.mxu0 %v1657
        %1675 = vmatprep.subr.bf16.mxu0 0
        %1676 = vmatpush1.bf16.msra.mxu0 %v1656
        %1677 = vmatprep.subr.bf16.mxu0 0
        %1678 = vmatpush1.bf16.msra.mxu0 %v1655
        %1679 = vmatprep.subr.bf16.mxu0 0
        %1680 = vmatpush1.bf16.msra.mxu0 %v1654
        %1681 = vmatprep.subr.bf16.mxu0 0
        %1682 = vmatpush2.bf16.msra.mxu0 0
        %1683 = vmatprep.subr.bf16.mxu0 0
        %1684 = vmatpush2.bf16.msra.mxu0 0
        %1685 = vmatprep.subr.bf16.mxu0 0
        %1686 = vmatpush2.bf16.msra.mxu0 0
        %1687 = vmatprep.subr.bf16.mxu0 0
        %1688 = vmatpush2.bf16.msra.mxu0 0
        %1689 = vmatprep.subr.bf16.mxu0 0
        %1690 = vmatpush2.bf16.msra.mxu0 0
        %1691 = vmatprep.subr.bf16.mxu0 0
        %1692 = vmatpush2.bf16.msra.mxu0 0
        %1693 = vmatprep.subr.bf16.mxu0 0
        %1694 = vmatpush2.bf16.msra.mxu0 0
        %1695 = vmatprep.subr.bf16.mxu0 0
        %1696 = vmatpush2.bf16.msra.mxu0 0
        %1697 = vmatprep.mubr.bf16.mxu0 0
        %1698 = vmatmul.mubr.bf16.gmra.mxu0 %v1663
        %v1699 = vpop.f32.mrf.mxu0
        %v1700 = vadd.f32 0.0, %v1699
        %v1701 = vpop.f32.mrf.mxu0
        %v1702 = vpop.f32.mrf.mxu0
        %v1703 = vpop.f32.mrf.mxu0
        %1704 = vdwg.mxu0
        %v1705 = vld [vmem:[%s4] sm:$0x1]
        %v1706 = vadd.f32 %v1705, %v620
        %v1707 = vadd.f32 %v1706, %v698
        %v1708 = vadd.f32 %v1707, %v776
        %v1709 = vadd.f32 %v1708, %v853
        %v1710 = vadd.f32 %v1709, %v930
        %v1711 = vadd.f32 %v1710, %v1007
        %v1712 = vadd.f32 %v1711, %v1084
        %v1713 = vadd.f32 %v1712, %v1161
        %v1714 = vadd.f32 %v1713, %v1238
        %v1715 = vadd.f32 %v1714, %v1315
        %v1716 = vadd.f32 %v1715, %v1392
        %v1717 = vadd.f32 %v1716, %v1469
        %v1718 = vadd.f32 %v1717, %v1546
        %v1719 = vadd.f32 %v1718, %v1623
        %v1720 = vadd.f32 %v1719, %v1700
        %v1721 = vmax.f32 %v1720, 0.0
        %v1722 = vpack.c.bf16 %v1721, %v1721
        %v1723 = vld [vmem:[#allocation10] sm:$0xf]
        %v1724 = vld [vmem:[#allocation10 + $0x4] sm:$0xf]
        %v1725 = vld [vmem:[#allocation10 + $0x8] sm:$0xf]
        %v1726 = vld [vmem:[#allocation10 + $0xc] sm:$0xf]
        %v1727 = vld [vmem:[#allocation10 + $0x10] sm:$0xf]
        %v1728 = vld [vmem:[#allocation10 + $0x14] sm:$0xf]
        %v1729 = vld [vmem:[#allocation10 + $0x18] sm:$0xf]
        %v1730 = vld [vmem:[#allocation10 + $0x1c] sm:$0xf]
        %v1731 = vld [vmem:[#allocation10 + $0x20] sm:$0xf]
        %v1732 = vld [vmem:[#allocation10 + $0x24] sm:$0xf]
        %v1733 = vld [vmem:[#allocation10 + $0x28] sm:$0xf]
        %v1734 = vld [vmem:[#allocation10 + $0x2c] sm:$0xf]
        %v1735 = vld [vmem:[#allocation10 + $0x30] sm:$0xf]
        %v1736 = vld [vmem:[#allocation10 + $0x34] sm:$0xf]
        %v1737 = vld [vmem:[#allocation10 + $0x38] sm:$0xf]
        %v1738 = vld [vmem:[#allocation10 + $0x3c] sm:$0xf]
        %v1739 = vld [vmem:[%s6] sm:$0x1]
        %v1756 = vunpack.c.l.b16 %v1723
        %v1757 = vunpack.c.l.b16 %v1724
        %v1758 = vunpack.c.l.b16 %v1725
        %v1759 = vunpack.c.l.b16 %v1726
        %v1760 = vunpack.c.l.b16 %v1727
        %v1761 = vunpack.c.l.b16 %v1728
        %v1762 = vunpack.c.l.b16 %v1729
        %v1763 = vunpack.c.l.b16 %v1730
        %v1764 = vunpack.c.l.b16 %v1731
        %v1765 = vunpack.c.l.b16 %v1732
        %v1766 = vunpack.c.l.b16 %v1733
        %v1767 = vunpack.c.l.b16 %v1734
        %v1768 = vunpack.c.l.b16 %v1735
        %v1769 = vunpack.c.l.b16 %v1736
        %v1770 = vunpack.c.l.b16 %v1737
        %v1771 = vunpack.c.l.b16 %v1738
        %v1772 = vpack.c.b16 %v1757, %v1756
        %v1773 = vpack.c.b16 %v1759, %v1758
        %v1774 = vpack.c.b16 %v1761, %v1760
        %v1775 = vpack.c.b16 %v1763, %v1762
        %v1776 = vpack.c.b16 %v1765, %v1764
        %v1777 = vpack.c.b16 %v1767, %v1766
        %v1778 = vpack.c.b16 %v1769, %v1768
        %v1779 = vpack.c.b16 %v1771, %v1770
        %1788 = vmatprep.subr.bf16.mxu0 0
        %1789 = vmatpush1.bf16.msra.mxu0 %v1779
        %1790 = vmatprep.subr.bf16.mxu0 0
        %1791 = vmatpush1.bf16.msra.mxu0 %v1778
        %1792 = vmatprep.subr.bf16.mxu0 0
        %1793 = vmatpush1.bf16.msra.mxu0 %v1777
        %1794 = vmatprep.subr.bf16.mxu0 0
        %1795 = vmatpush1.bf16.msra.mxu0 %v1776
        %1796 = vmatprep.subr.bf16.mxu0 0
        %1797 = vmatpush1.bf16.msra.mxu0 %v1775
        %1798 = vmatprep.subr.bf16.mxu0 0
        %1799 = vmatpush1.bf16.msra.mxu0 %v1774
        %1800 = vmatprep.subr.bf16.mxu0 0
        %1801 = vmatpush1.bf16.msra.mxu0 %v1773
        %1802 = vmatprep.subr.bf16.mxu0 0
        %1803 = vmatpush1.bf16.msra.mxu0 %v1772
        %1804 = vmatprep.subr.bf16.mxu0 0
        %1805 = vmatpush2.bf16.msra.mxu0 0
        %1806 = vmatprep.subr.bf16.mxu0 0
        %1807 = vmatpush2.bf16.msra.mxu0 0
        %1808 = vmatprep.subr.bf16.mxu0 0
        %1809 = vmatpush2.bf16.msra.mxu0 0
        %1810 = vmatprep.subr.bf16.mxu0 0
        %1811 = vmatpush2.bf16.msra.mxu0 0
        %1812 = vmatprep.subr.bf16.mxu0 0
        %1813 = vmatpush2.bf16.msra.mxu0 0
        %1814 = vmatprep.subr.bf16.mxu0 0
        %1815 = vmatpush2.bf16.msra.mxu0 0
        %1816 = vmatprep.subr.bf16.mxu0 0
        %1817 = vmatpush2.bf16.msra.mxu0 0
        %1818 = vmatprep.subr.bf16.mxu0 0
        %1819 = vmatpush2.bf16.msra.mxu0 0
        %1820 = vmatprep.mubr.bf16.mxu0 0
        %1821 = vmatmul.mubr.bf16.gmra.mxu0 %v1722
        %v1822 = vpop.f32.mrf.mxu0
        %v1823 = vadd.f32 %v1739, %v1822
        %v1824 = vpop.f32.mrf.mxu0
        %v1825 = vpop.f32.mrf.mxu0
        %v1826 = vpop.f32.mrf.mxu0
        %1827 = vdwg.mxu0
        %v1828 = vlaneseq
        %v1829 = vshrl.u32 %v1828, 7
        %v1830 = vsub.s32 0, %v1829
        %v1831 = vrot.slane %v1823, %v1830
        %1832 = vst [vmem:[%s354] sm:$0xff] %v1831
        %s1833 = sand.u32 %s186, 1
        %s1834 = scalar_lea.sflag [#allocation4], %s1833
        %s1835 = sand.u32 %s186, 1
        %s1836 = smul.addr %s1835, 8
        %s1837 = scalar_lea.vmem [#allocation11], %s1836
        // Predicated region
        $region69: #{tpu_custom_call.1} parent=47 // pred_check
          %p1838 = pneg %p196
        $region70: #{tpu_custom_call.1} parent=47 // pred_check_branch
          %1840 = sbr.rel (%p1838) target = $region72
        $region71: #{tpu_custom_call.1} parent=47 // pred_region
          %s1842 = ssub.s32 128, 128
          %1843 = vsyncadd %s1834, %s1842
          %s1844 = smul.addr %s26, 128
          %s1845 = scalar_lea.hbm %s7, %s1844
          %s1847 = sshll.u32 %s1837, 4
          %s1848 = int_to_ptr.vmem [resolvable:$true] %s1847
          %1850 = dma.vmem_to_hbm [thread:$0]  %s1848, 128, %s1845, %s1834
        $region72: #{tpu_custom_call.1} parent=47 // pred_fallthru
          _
      $region48: #{tpu_custom_call.1} parent=5 // pred_fallthru
        _
      %p1851 = scmp.le.s32.totalorder 2, %s21
      // Predicated region
      $region73: #{tpu_custom_call.1} parent=5 // pred_check
        %p1852 = pneg %p1851
      $region74: #{tpu_custom_call.1} parent=5 // pred_check_branch
        %1854 = sbr.rel (%p1852) target = $region76
      $region75: #{tpu_custom_call.1} parent=5 // pred_region
        %s1855 = ssub.s32 %s21, 2
        // Predicated region
        $region77: #{tpu_custom_call.1} parent=75 // pred_check
          %p1856 = pneg %p202
        $region78: #{tpu_custom_call.1} parent=75 // pred_check_branch
          %1858 = sbr.rel (%p1856) target = $region80
        $region79: #{tpu_custom_call.1} parent=75 // pred_region
          %s1859 = sand.u32 %s187, 1
          %s1860 = scalar_lea.sflag [#allocation4], %s1859
          %s1861 = sand.u32 %s187, 1
          %s1862 = smul.addr %s1861, 8
          %s1863 = scalar_lea.vmem [#allocation11], %s1862
          %1864 = dma.done %s1860, 128
        $region80: #{tpu_custom_call.1} parent=75 // pred_fallthru
          _
      $region76: #{tpu_custom_call.1} parent=5 // pred_fallthru
        _
    $region6: #{tpu_custom_call.1} parent=1 // loop_footer
      %s25 = sadd.s32 1, %s21
    $region7: #{tpu_custom_call.1} parent=1 // loop_footer_branch
      %20 = sbr.rel target = $region3
    $region8: #{tpu_custom_call.1} parent=1 // loop_exit
      _
    %1865 = vsyncpa [#allocation3], 1
    %s1866 = scalar_lea.sflag [#allocation3], 1
    %1867 = vsyncpa %s1866, 1
    %1868 = vsyncpa [#allocation6], 1
    %s1869 = scalar_lea.sflag [#allocation6], 1
    %1870 = vsyncpa %s1869, 1
    %1871 = vsyncpa [#allocation9], 1
    %1872 = vsyncpa [#allocation4], 1
    %s1873 = scalar_lea.sflag [#allocation4], 1
    %1874 = vsyncpa %s1873, 1

</llo_original>
